<compile_context>
chip_gen: v7x
topology: tpu7x:2x2x1
jax: 0.10.0
libtpu: 0.0.40
codegen_flags: <defaults>
</compile_context>

<pallas_src>
import jax
import jax.numpy as jnp
from jax.experimental import pallas as pl
from jax.experimental.pallas import tpu as pltpu


# ----------------------------------------------------------------------------
# helpers
# ----------------------------------------------------------------------------
def _round_up(x, m):
    return ((x + m - 1) // m) * m


def _pad2d(a, rows, cols):
    r, c = a.shape
    return jnp.pad(a, ((0, rows - r), (0, cols - c)))


def _pick_vmem_limit():
    """~3/4 of physical VMEM, capped at 100 MiB, conservative fallback."""
    try:
        cap = int(pltpu.get_tpu_info().vmem_capacity_bytes)
    except Exception:
        return 32 * 1024 * 1024
    return int(min(100 * 1024 * 1024, max(32 * 1024 * 1024, cap * 3 // 4)))


# ----------------------------------------------------------------------------
# Fused Pallas kernel: all GINE layers + head epilogue
# ----------------------------------------------------------------------------
def _ginet_fused_kernel(
    a_ref, h0_ref, c_ref,                              # graph structure / init h
    e_ref, w1_ref, b1_ref, w2_ref, b2_ref,             # per-layer params
    p_ref, wf_ref, bf_ref,                             # pooling + feat_lin
    wp1_ref, bp1_ref, wp2_ref, bp2_ref, wp3_ref, bp3_ref,   # pred_head
    feat_ref, proj_ref,                                # outputs
    h_scr,                                             # VMEM scratch (bf16)
):
    layer = pl.program_id(0)
    last = pl.num_programs(0) - 1

    # initialize the resident node-feature accumulator at the first layer
    @pl.when(layer == 0)
    def _():
        h_scr[...] = h0_ref[...]

    h = h_scr[...]                                     # bf16 [Np, Dp]

    # aggregation: sum_{e->i} (h[src_e] + edge_emb_l[e])
    #   = A @ h + C @ E_l          (A, C hold exact small counts; bf16 exact)
    aggr = jnp.dot(a_ref[...], h, preferred_element_type=jnp.float32)
    aggr = aggr + jnp.dot(c_ref[...], e_ref[...],
                          preferred_element_type=jnp.float32)

    # GINEConv update MLP: Linear(D, 2D) -> ReLU -> Linear(2D, D)
    # bf16 weights / activations on the MXU, f32 accumulation + biases.
    hid = jnp.dot(aggr.astype(jnp.bfloat16), w1_ref[...],
                  preferred_element_type=jnp.float32) + b1_ref[...]
    hid = jnp.maximum(hid, 0.0)
    out = jnp.dot(hid.astype(jnp.bfloat16), w2_ref[...],
                  preferred_element_type=jnp.float32) + b2_ref[...]

    # inter-layer ReLU (dropout = identity in inference)
    @pl.when(layer < last)
    def _():
        h_scr[...] = jnp.maximum(out, 0.0).astype(jnp.bfloat16)

    # last layer: no ReLU; pooling + feat_lin + pred_head epilogue (f32)
    @pl.when(layer == last)
    def _():
        pooled = jnp.dot(p_ref[...], out, preferred_element_type=jnp.float32)
        feat = jnp.dot(pooled, wf_ref[...],
                       preferred_element_type=jnp.float32) + bf_ref[...]
        z = jnp.maximum(
            jnp.dot(feat, wp1_ref[...], preferred_element_type=jnp.float32)
            + bp1_ref[...], 0.0)
        z = jnp.maximum(
            jnp.dot(z, wp2_ref[...], preferred_element_type=jnp.float32)
            + bp2_ref[...], 0.0)
        proj = jnp.dot(z, wp3_ref[...],
                       preferred_element_type=jnp.float32) + bp3_ref[...]
        feat_ref[...] = feat
        proj_ref[...] = proj


# ----------------------------------------------------------------------------
# Parameter construction (deterministic, synthetic, logical shapes)
# ----------------------------------------------------------------------------
def xavier_uniform(key, shape):
    fan_in, fan_out = shape[0], shape[1]
    bound = (6.0 / (fan_in + fan_out)) ** 0.5
    return jax.random.uniform(key, shape, jnp.float32, -bound, bound)


def make_params(key, *, num_layer, emb_dim, feat_dim, out_dim,
                num_atom_type=119, num_chirality_tag=3,
                num_bond_type=5, num_bond_direction=3):
    keys = iter(jax.random.split(key, 64))
    p = {}
    p["x_emb1"] = xavier_uniform(next(keys), (num_atom_type, emb_dim))
    p["x_emb2"] = xavier_uniform(next(keys), (num_chirality_tag, emb_dim))
    p["layers"] = []
    for _ in range(num_layer):
        lp = {
            "edge_emb1": xavier_uniform(next(keys), (num_bond_type, emb_dim)),
            "edge_emb2": xavier_uniform(next(keys), (num_bond_direction, emb_dim)),
            "w1": xavier_uniform(next(keys), (emb_dim, 2 * emb_dim)),
            "b1": jnp.zeros((1, 2 * emb_dim), jnp.float32),
            "w2": xavier_uniform(next(keys), (2 * emb_dim, emb_dim)),
            "b2": jnp.zeros((1, emb_dim), jnp.float32),
        }
        p["layers"].append(lp)
    p["feat_w"] = xavier_uniform(next(keys), (emb_dim, feat_dim))
    p["feat_b"] = jnp.zeros((1, feat_dim), jnp.float32)
    # pred_head (pred_act='relu', pred_n_layer=2):
    #   Linear(F, F/2), ReLU, Linear(F/2, F/2), ReLU, Linear(F/2, out_dim)
    p["pred_w1"] = xavier_uniform(next(keys), (feat_dim, feat_dim // 2))
    p["pred_b1"] = jnp.zeros((1, feat_dim // 2), jnp.float32)
    p["pred_w2"] = xavier_uniform(next(keys), (feat_dim // 2, feat_dim // 2))
    p["pred_b2"] = jnp.zeros((1, feat_dim // 2), jnp.float32)
    p["pred_w3"] = xavier_uniform(next(keys), (feat_dim // 2, out_dim))
    p["pred_b3"] = jnp.zeros((1, out_dim), jnp.float32)
    return p


# ----------------------------------------------------------------------------
# Forward pass (cheap glue in JAX, whole hot path in one Pallas kernel)
# ----------------------------------------------------------------------------
def ginet_forward(params, x, edge_index, edge_attr, batch, *, num_graphs):
    num_layer = len(params["layers"])
    emb_dim = params["x_emb1"].shape[1]
    feat_dim = params["feat_w"].shape[1]
    hid2 = params["layers"][0]["w1"].shape[1]          # 2 * emb_dim
    half = params["pred_w1"].shape[1]                  # feat_dim // 2
    out_dim = params["pred_w3"].shape[1]
    nbt = params["layers"][0]["edge_emb1"].shape[0]    # num_bond_type (5)
    nbd = params["layers"][0]["edge_emb2"].shape[0]    # num_bond_direction (3)

    n = x.shape[0]
    LANE, SUB = 128, 8
    Dp = _round_up(emb_dim, LANE)
    Hp = _round_up(hid2, LANE)
    Fp = _round_up(feat_dim, LANE)
    F2p = _round_up(half, LANE)
    Op = _round_up(out_dim, LANE)
    # Node dim padded to LANE width (it is the lane dim of A/P and the K dim
    # of the dominant A@h matmul) -> lane-dense layout, 128-aligned K.
    Np = _round_up(n, LANE)
    Bp = _round_up(num_graphs, SUB)
    CEp = _round_up(nbt + nbd, SUB)                    # fused edge-type width

    # --- node embedding: x_embedding1(x[:,0]) + x_embedding2(x[:,1]) ---------
    h0 = (jnp.take(params["x_emb1"], x[:, 0], axis=0)
          + jnp.take(params["x_emb2"], x[:, 1], axis=0)).astype(jnp.float32)
    h0 = _pad2d(h0, Np, Dp).astype(jnp.bfloat16)       # h only feeds bf16 A@h

    # --- self-loops + fused graph-structure matrices -------------------------
    nodes = jnp.arange(n, dtype=edge_index.dtype)
    src = jnp.concatenate([edge_index[0], nodes])
    dst = jnp.concatenate([edge_index[1], nodes])
    ea0 = jnp.concatenate([edge_attr[:, 0],
                           jnp.full((n,), 4, edge_attr.dtype)])   # self-loop type 4
    ea1 = jnp.concatenate([edge_attr[:, 1],
                           jnp.zeros((n,), edge_attr.dtype)])     # direction 0

    # A[i, j] = #edges j->i (incl. self-loops); exact small ints -> bf16 exact.
    A = (jnp.zeros((Np, Np), jnp.float32).at[dst, src].add(1.0)
         ).astype(jnp.bfloat16)
    # C[i, t] = #incoming edges of node i with bond type t (t<nbt) or
    #           bond direction t-nbt (t>=nbt); single fused K=8 contraction.
    C = (jnp.zeros((Np, CEp), jnp.float32)
         .at[dst, ea0].add(1.0)
         .at[dst, nbt + ea1].add(1.0)).astype(jnp.bfloat16)

    # --- per-layer parameter stacks [L, ...] (zero-padded, bf16 weights) ------
    e_s = jnp.stack([
        _pad2d(jnp.concatenate([lp["edge_emb1"], lp["edge_emb2"]], axis=0),
               CEp, Dp)
        for lp in params["layers"]]).astype(jnp.bfloat16)
    w1_s = jnp.stack([_pad2d(lp["w1"], Dp, Hp)
                      for lp in params["layers"]]).astype(jnp.bfloat16)
    b1_s = jnp.stack([_pad2d(lp["b1"], 1, Hp) for lp in params["layers"]])
    w2_s = jnp.stack([_pad2d(lp["w2"], Hp, Dp)
                      for lp in params["layers"]]).astype(jnp.bfloat16)
    b2_s = jnp.stack([_pad2d(lp["b2"], 1, Dp) for lp in params["layers"]])

    # --- global mean pool membership, scale folded in -------------------------
    P = jnp.zeros((Bp, Np), jnp.float32).at[batch, jnp.arange(n)].set(1.0)
    counts = P.sum(axis=1, keepdims=True)
    P_mean = P / jnp.maximum(counts, 1.0)

    # --- head params (padded, f32: epilogue runs once) -------------------------
    wf = _pad2d(params["feat_w"], Dp, Fp)
    bf = _pad2d(params["feat_b"], 1, Fp)
    wp1 = _pad2d(params["pred_w1"], Fp, F2p)
    bp1 = _pad2d(params["pred_b1"], 1, F2p)
    wp2 = _pad2d(params["pred_w2"], F2p, F2p)
    bp2 = _pad2d(params["pred_b2"], 1, F2p)
    wp3 = _pad2d(params["pred_w3"], F2p, Op)
    bp3 = _pad2d(params["pred_b3"], 1, Op)

    # --- single fused pallas_call: grid = (num_layer,) over the layer axis ----
    # Residents never change across the layer grid -> single-buffer them.
    resident = lambda shape: pl.BlockSpec(shape, lambda l: (0, 0),
                                          pipeline_mode=pl.Buffered(1))
    # Per-layer weights change every step -> keep default 2-deep pipelining.
    per_layer = lambda shape: pl.BlockSpec((None,) + shape, lambda l: (l, 0, 0))

    feat_pad, proj_pad = pl.pallas_call(
        _ginet_fused_kernel,
        grid=(num_layer,),
        out_shape=(jax.ShapeDtypeStruct((Bp, Fp), jnp.float32),
                   jax.ShapeDtypeStruct((Bp, Op), jnp.float32)),
        in_specs=[
            resident((Np, Np)),        # A (bf16)
            resident((Np, Dp)),        # h0 (bf16)
            resident((Np, CEp)),       # C (bf16)
            per_layer((CEp, Dp)),      # fused edge embeddings E[l] (bf16)
            per_layer((Dp, Hp)),       # mlp w1[l] (bf16)
            per_layer((1, Hp)),        # mlp b1[l]
            per_layer((Hp, Dp)),       # mlp w2[l] (bf16)
            per_layer((1, Dp)),        # mlp b2[l]
            resident((Bp, Np)),        # pooling membership (mean scale folded)
            resident((Dp, Fp)),        # feat_lin w
            resident((1, Fp)),         # feat_lin b
            resident((Fp, F2p)),       # pred w1
            resident((1, F2p)),        # pred b1
            resident((F2p, F2p)),      # pred w2
            resident((1, F2p)),        # pred b2
            resident((F2p, Op)),       # pred w3
            resident((1, Op)),         # pred b3
        ],
        out_specs=(pl.BlockSpec((Bp, Fp), lambda l: (0, 0)),
                   pl.BlockSpec((Bp, Op), lambda l: (0, 0))),
        scratch_shapes=[pltpu.VMEM((Np, Dp), jnp.bfloat16)],
        compiler_params=pltpu.CompilerParams(
            dimension_semantics=("arbitrary",),     # layer axis carries h
            vmem_limit_bytes=_pick_vmem_limit(),    # per-generation budget
        ),
    )(A, h0, C, e_s, w1_s, b1_s, w2_s, b2_s,
      P_mean, wf, bf, wp1, bp1, wp2, bp2, wp3, bp3)

    return feat_pad[:num_graphs, :feat_dim], proj_pad[:num_graphs, :out_dim]


# ----------------------------------------------------------------------------
if __name__ == "__main__":
    # small, module-consistent shapes
    N, E, B = 16, 32, 2            # nodes, directed edges, graphs
    NUM_LAYER, EMB_DIM, FEAT_DIM, OUT_DIM = 3, 32, 64, 8
    NUM_ATOM_TYPE, NUM_CHIRALITY = 119, 3

    key = jax.random.PRNGKey(0)
    k_param, k_x0, k_x1, k_src, k_dst, k_ea0, k_ea1 = jax.random.split(key, 7)

    params = make_params(k_param, num_layer=NUM_LAYER, emb_dim=EMB_DIM,
                         feat_dim=FEAT_DIM, out_dim=OUT_DIM,
                         num_atom_type=NUM_ATOM_TYPE,
                         num_chirality_tag=NUM_CHIRALITY)

    # data.x : [N, 2] integer atom features
    x = jnp.stack([
        jax.random.randint(k_x0, (N,), 0, NUM_ATOM_TYPE, jnp.int32),
        jax.random.randint(k_x1, (N,), 0, NUM_CHIRALITY, jnp.int32),
    ], axis=1)
    # data.edge_index : [2, E]
    edge_index = jnp.stack([
        jax.random.randint(k_src, (E,), 0, N, jnp.int32),
        jax.random.randint(k_dst, (E,), 0, N, jnp.int32),
    ], axis=0)
    # data.edge_attr : [E, 2] (bond type, bond direction)
    edge_attr = jnp.stack([
        jax.random.randint(k_ea0, (E,), 0, 4, jnp.int32),
        jax.random.randint(k_ea1, (E,), 0, 3, jnp.int32),
    ], axis=1)
    # data.batch : [N] graph membership
    batch = jnp.concatenate([jnp.zeros(N // 2, jnp.int32),
                             jnp.ones(N - N // 2, jnp.int32)])

    feat, proj = ginet_forward(params, x, edge_index, edge_attr, batch,
                               num_graphs=B)
    jax.block_until_ready((feat, proj))

    assert feat.shape == (B, FEAT_DIM) and proj.shape == (B, OUT_DIM)
    assert jnp.all(jnp.isfinite(feat)) and jnp.all(jnp.isfinite(proj))
    print("KERNEL_OK")
</pallas_src>

<mosaic_0001>
module attributes {stable_mosaic.version = 11 : i64} {
  func.func @_ginet_fused_kernel(%arg0: i32, %arg1: memref<128x128xbf16, #tpu.memory_space<vmem>>, %arg2: memref<128x128xbf16, #tpu.memory_space<vmem>>, %arg3: memref<128x8xbf16, #tpu.memory_space<vmem>>, %arg4: memref<1x8x128xbf16, #tpu.memory_space<vmem>>, %arg5: memref<1x128x128xbf16, #tpu.memory_space<vmem>>, %arg6: memref<1x1x128xf32, #tpu.memory_space<vmem>>, %arg7: memref<1x128x128xbf16, #tpu.memory_space<vmem>>, %arg8: memref<1x1x128xf32, #tpu.memory_space<vmem>>, %arg9: memref<8x128xf32, #tpu.memory_space<vmem>>, %arg10: memref<128x128xf32, #tpu.memory_space<vmem>>, %arg11: memref<1x128xf32, #tpu.memory_space<vmem>>, %arg12: memref<128x128xf32, #tpu.memory_space<vmem>>, %arg13: memref<1x128xf32, #tpu.memory_space<vmem>>, %arg14: memref<128x128xf32, #tpu.memory_space<vmem>>, %arg15: memref<1x128xf32, #tpu.memory_space<vmem>>, %arg16: memref<128x128xf32, #tpu.memory_space<vmem>>, %arg17: memref<1x128xf32, #tpu.memory_space<vmem>>, %arg18: memref<8x128xf32, #tpu.memory_space<vmem>>, %arg19: memref<8x128xf32, #tpu.memory_space<vmem>>, %arg20: memref<128x128xbf16, #tpu.memory_space<vmem>>) attributes {dimension_semantics = [#tpu.dimension_semantics<arbitrary>], iteration_bounds = array<i64: 3>, scalar_prefetch = 0 : i64, scratch_operands = 1 : i64, tpu.core_type = #tpu.core_type<tc>, window_params = [{pipeline_mode = #tpu.pipeline_mode<synchronous>, transform_indices = @transform_0, window_bounds = array<i64: 128, 128>}, {pipeline_mode = #tpu.pipeline_mode<synchronous>, transform_indices = @transform_1, window_bounds = array<i64: 128, 128>}, {pipeline_mode = #tpu.pipeline_mode<synchronous>, transform_indices = @transform_2, window_bounds = array<i64: 128, 8>}, {transform_indices = @transform_3, window_bounds = array<i64: 1, 8, 128>}, {transform_indices = @transform_4, window_bounds = array<i64: 1, 128, 128>}, {transform_indices = @transform_5, window_bounds = array<i64: 1, 1, 128>}, {transform_indices = @transform_6, window_bounds = array<i64: 1, 128, 128>}, {transform_indices = @transform_7, window_bounds = array<i64: 1, 1, 128>}, {pipeline_mode = #tpu.pipeline_mode<synchronous>, transform_indices = @transform_8, window_bounds = array<i64: 8, 128>}, {pipeline_mode = #tpu.pipeline_mode<synchronous>, transform_indices = @transform_9, window_bounds = array<i64: 128, 128>}, {pipeline_mode = #tpu.pipeline_mode<synchronous>, transform_indices = @transform_10, window_bounds = array<i64: 1, 128>}, {pipeline_mode = #tpu.pipeline_mode<synchronous>, transform_indices = @transform_11, window_bounds = array<i64: 128, 128>}, {pipeline_mode = #tpu.pipeline_mode<synchronous>, transform_indices = @transform_12, window_bounds = array<i64: 1, 128>}, {pipeline_mode = #tpu.pipeline_mode<synchronous>, transform_indices = @transform_13, window_bounds = array<i64: 128, 128>}, {pipeline_mode = #tpu.pipeline_mode<synchronous>, transform_indices = @transform_14, window_bounds = array<i64: 1, 128>}, {pipeline_mode = #tpu.pipeline_mode<synchronous>, transform_indices = @transform_15, window_bounds = array<i64: 128, 128>}, {pipeline_mode = #tpu.pipeline_mode<synchronous>, transform_indices = @transform_16, window_bounds = array<i64: 1, 128>}, {pipeline_mode = #tpu.pipeline_mode<synchronous>, transform_indices = @transform_17, window_bounds = array<i64: 8, 128>}, {pipeline_mode = #tpu.pipeline_mode<synchronous>, transform_indices = @transform_18, window_bounds = array<i64: 8, 128>}]} {
    %c0_i32 = arith.constant 0 : i32
    %0 = arith.cmpi eq, %arg0, %c0_i32 : i32
    %1 = arith.extui %0 : i1 to i32
    %c0_i32_0 = arith.constant 0 : i32
    %2 = arith.cmpi ne, %1, %c0_i32_0 : i32
    scf.if %2 {
      %c0_28 = arith.constant 0 : index
      %c0_29 = arith.constant 0 : index
      %35 = vector.load %arg2[%c0_28, %c0_29] : memref<128x128xbf16, #tpu.memory_space<vmem>>, vector<128x128xbf16>
      %c0_30 = arith.constant 0 : index
      %c0_31 = arith.constant 0 : index
      %36 = vector.load %arg20[%c0_30, %c0_31] : memref<128x128xbf16, #tpu.memory_space<vmem>>, vector<128x128xbf16>
      tpu.vector_store %arg20[%c0_30, %c0_31], %35 {strides = array<i32>} : memref<128x128xbf16, #tpu.memory_space<vmem>>, vector<128x128xbf16>,
    } else {
    }
    %c0 = arith.constant 0 : index
    %c0_1 = arith.constant 0 : index
    %3 = vector.load %arg20[%c0, %c0_1] : memref<128x128xbf16, #tpu.memory_space<vmem>>, vector<128x128xbf16>
    %c0_2 = arith.constant 0 : index
    %c0_3 = arith.constant 0 : index
    %4 = vector.load %arg1[%c0_2, %c0_3] : memref<128x128xbf16, #tpu.memory_space<vmem>>, vector<128x128xbf16>
    %cst = arith.constant dense<0.000000e+00> : vector<128x128xf32>
    %5 = tpu.matmul %4, %3, %cst {dimension_numbers = #tpu.dot_dimension_numbers<[1], [0], [0], [1], [0, 0, 1, 1], [], []>} : vector<128x128xbf16>, vector<128x128xbf16>, vector<128x128xf32> -> vector<128x128xf32>
    %c0_4 = arith.constant 0 : index
    %c0_5 = arith.constant 0 : index
    %6 = vector.load %arg3[%c0_4, %c0_5] : memref<128x8xbf16, #tpu.memory_space<vmem>>, vector<128x8xbf16>
    %c0_6 = arith.constant 0 : index
    %c0_7 = arith.constant 0 : index
    %c0_8 = arith.constant 0 : index
    %7 = vector.load %arg4[%c0_6, %c0_7, %c0_8] : memref<1x8x128xbf16, #tpu.memory_space<vmem>>, vector<1x8x128xbf16>
    %8 = vector.shape_cast %7 : vector<1x8x128xbf16> to vector<8x128xbf16>
    %cst_9 = arith.constant dense<0.000000e+00> : vector<128x128xf32>
    %9 = tpu.matmul %6, %8, %cst_9 {dimension_numbers = #tpu.dot_dimension_numbers<[1], [0], [0], [1], [0, 0, 1, 1], [], []>} : vector<128x8xbf16>, vector<8x128xbf16>, vector<128x128xf32> -> vector<128x128xf32>
    %10 = arith.addf %5, %9 : vector<128x128xf32>
    %11 = arith.truncf %10 : vector<128x128xf32> to vector<128x128xbf16>
    %c0_10 = arith.constant 0 : index
    %c0_11 = arith.constant 0 : index
    %c0_12 = arith.constant 0 : index
    %12 = vector.load %arg5[%c0_10, %c0_11, %c0_12] : memref<1x128x128xbf16, #tpu.memory_space<vmem>>, vector<1x128x128xbf16>
    %13 = vector.shape_cast %12 : vector<1x128x128xbf16> to vector<128x128xbf16>
    %cst_13 = arith.constant dense<0.000000e+00> : vector<128x128xf32>
    %14 = tpu.matmul %11, %13, %cst_13 {dimension_numbers = #tpu.dot_dimension_numbers<[1], [0], [0], [1], [0, 0, 1, 1], [], []>} : vector<128x128xbf16>, vector<128x128xbf16>, vector<128x128xf32> -> vector<128x128xf32>
    %c0_14 = arith.constant 0 : index
    %c0_15 = arith.constant 0 : index
    %c0_16 = arith.constant 0 : index
    %15 = vector.load %arg6[%c0_14, %c0_15, %c0_16] : memref<1x1x128xf32, #tpu.memory_space<vmem>>, vector<1x1x128xf32>
    %16 = vector.shape_cast %15 : vector<1x1x128xf32> to vector<1x128xf32>
    %17 = vector.broadcast %16 : vector<1x128xf32> to vector<128x128xf32>
    %18 = arith.addf %14, %17 : vector<128x128xf32>
    %cst_17 = arith.constant 0.000000e+00 : f32
    %19 = vector.broadcast %cst_17 : f32 to vector<128x128xf32>
    %20 = arith.maximumf %18, %19 : vector<128x128xf32>
    %21 = arith.truncf %20 : vector<128x128xf32> to vector<128x128xbf16>
    %c0_18 = arith.constant 0 : index
    %c0_19 = arith.constant 0 : index
    %c0_20 = arith.constant 0 : index
    %22 = vector.load %arg7[%c0_18, %c0_19, %c0_20] : memref<1x128x128xbf16, #tpu.memory_space<vmem>>, vector<1x128x128xbf16>
    %23 = vector.shape_cast %22 : vector<1x128x128xbf16> to vector<128x128xbf16>
    %cst_21 = arith.constant dense<0.000000e+00> : vector<128x128xf32>
    %24 = tpu.matmul %21, %23, %cst_21 {dimension_numbers = #tpu.dot_dimension_numbers<[1], [0], [0], [1], [0, 0, 1, 1], [], []>} : vector<128x128xbf16>, vector<128x128xbf16>, vector<128x128xf32> -> vector<128x128xf32>
    %c0_22 = arith.constant 0 : index
    %c0_23 = arith.constant 0 : index
    %c0_24 = arith.constant 0 : index
    %25 = vector.load %arg8[%c0_22, %c0_23, %c0_24] : memref<1x1x128xf32, #tpu.memory_space<vmem>>, vector<1x1x128xf32>
    %26 = vector.shape_cast %25 : vector<1x1x128xf32> to vector<1x128xf32>
    %27 = vector.broadcast %26 : vector<1x128xf32> to vector<128x128xf32>
    %28 = arith.addf %24, %27 : vector<128x128xf32>
    %c2_i32 = arith.constant 2 : i32
    %29 = arith.cmpi slt, %arg0, %c2_i32 : i32
    %30 = arith.extui %29 : i1 to i32
    %c0_i32_25 = arith.constant 0 : i32
    %31 = arith.cmpi ne, %30, %c0_i32_25 : i32
    scf.if %31 {
      %cst_28 = arith.constant 0.000000e+00 : f32
      %35 = vector.broadcast %cst_28 : f32 to vector<128x128xf32>
      %36 = arith.maximumf %28, %35 : vector<128x128xf32>
      %37 = arith.truncf %36 : vector<128x128xf32> to vector<128x128xbf16>
      %c0_29 = arith.constant 0 : index
      %c0_30 = arith.constant 0 : index
      %38 = vector.load %arg20[%c0_29, %c0_30] : memref<128x128xbf16, #tpu.memory_space<vmem>>, vector<128x128xbf16>
      tpu.vector_store %arg20[%c0_29, %c0_30], %37 {strides = array<i32>} : memref<128x128xbf16, #tpu.memory_space<vmem>>, vector<128x128xbf16>,
    } else {
    }
    %c2_i32_26 = arith.constant 2 : i32
    %32 = arith.cmpi eq, %arg0, %c2_i32_26 : i32
    %33 = arith.extui %32 : i1 to i32
    %c0_i32_27 = arith.constant 0 : i32
    %34 = arith.cmpi ne, %33, %c0_i32_27 : i32
    scf.if %34 {
      %c0_28 = arith.constant 0 : index
      %c0_29 = arith.constant 0 : index
      %35 = vector.load %arg9[%c0_28, %c0_29] : memref<8x128xf32, #tpu.memory_space<vmem>>, vector<8x128xf32>
      %cst_30 = arith.constant dense<0.000000e+00> : vector<8x128xf32>
      %36 = tpu.matmul %35, %28, %cst_30 {dimension_numbers = #tpu.dot_dimension_numbers<[1], [0], [0], [1], [0, 0, 1, 1], [], []>} : vector<8x128xf32>, vector<128x128xf32>, vector<8x128xf32> -> vector<8x128xf32>
      %c0_31 = arith.constant 0 : index
      %c0_32 = arith.constant 0 : index
      %37 = vector.load %arg10[%c0_31, %c0_32] : memref<128x128xf32, #tpu.memory_space<vmem>>, vector<128x128xf32>
      %cst_33 = arith.constant dense<0.000000e+00> : vector<8x128xf32>
      %38 = tpu.matmul %36, %37, %cst_33 {dimension_numbers = #tpu.dot_dimension_numbers<[1], [0], [0], [1], [0, 0, 1, 1], [], []>} : vector<8x128xf32>, vector<128x128xf32>, vector<8x128xf32> -> vector<8x128xf32>
      %c0_34 = arith.constant 0 : index
      %c0_35 = arith.constant 0 : index
      %39 = vector.load %arg11[%c0_34, %c0_35] : memref<1x128xf32, #tpu.memory_space<vmem>>, vector<1x128xf32>
      %40 = vector.broadcast %39 : vector<1x128xf32> to vector<8x128xf32>
      %41 = arith.addf %38, %40 : vector<8x128xf32>
      %c0_36 = arith.constant 0 : index
      %c0_37 = arith.constant 0 : index
      %42 = vector.load %arg12[%c0_36, %c0_37] : memref<128x128xf32, #tpu.memory_space<vmem>>, vector<128x128xf32>
      %cst_38 = arith.constant dense<0.000000e+00> : vector<8x128xf32>
      %43 = tpu.matmul %41, %42, %cst_38 {dimension_numbers = #tpu.dot_dimension_numbers<[1], [0], [0], [1], [0, 0, 1, 1], [], []>} : vector<8x128xf32>, vector<128x128xf32>, vector<8x128xf32> -> vector<8x128xf32>
      %c0_39 = arith.constant 0 : index
      %c0_40 = arith.constant 0 : index
      %44 = vector.load %arg13[%c0_39, %c0_40] : memref<1x128xf32, #tpu.memory_space<vmem>>, vector<1x128xf32>
      %45 = vector.broadcast %44 : vector<1x128xf32> to vector<8x128xf32>
      %46 = arith.addf %43, %45 : vector<8x128xf32>
      %cst_41 = arith.constant 0.000000e+00 : f32
      %47 = vector.broadcast %cst_41 : f32 to vector<8x128xf32>
      %48 = arith.maximumf %46, %47 : vector<8x128xf32>
      %c0_42 = arith.constant 0 : index
      %c0_43 = arith.constant 0 : index
      %49 = vector.load %arg14[%c0_42, %c0_43] : memref<128x128xf32, #tpu.memory_space<vmem>>, vector<128x128xf32>
      %cst_44 = arith.constant dense<0.000000e+00> : vector<8x128xf32>
      %50 = tpu.matmul %48, %49, %cst_44 {dimension_numbers = #tpu.dot_dimension_numbers<[1], [0], [0], [1], [0, 0, 1, 1], [], []>} : vector<8x128xf32>, vector<128x128xf32>, vector<8x128xf32> -> vector<8x128xf32>
      %c0_45 = arith.constant 0 : index
      %c0_46 = arith.constant 0 : index
      %51 = vector.load %arg15[%c0_45, %c0_46] : memref<1x128xf32, #tpu.memory_space<vmem>>, vector<1x128xf32>
      %52 = vector.broadcast %51 : vector<1x128xf32> to vector<8x128xf32>
      %53 = arith.addf %50, %52 : vector<8x128xf32>
      %cst_47 = arith.constant 0.000000e+00 : f32
      %54 = vector.broadcast %cst_47 : f32 to vector<8x128xf32>
      %55 = arith.maximumf %53, %54 : vector<8x128xf32>
      %c0_48 = arith.constant 0 : index
      %c0_49 = arith.constant 0 : index
      %56 = vector.load %arg16[%c0_48, %c0_49] : memref<128x128xf32, #tpu.memory_space<vmem>>, vector<128x128xf32>
      %cst_50 = arith.constant dense<0.000000e+00> : vector<8x128xf32>
      %57 = tpu.matmul %55, %56, %cst_50 {dimension_numbers = #tpu.dot_dimension_numbers<[1], [0], [0], [1], [0, 0, 1, 1], [], []>} : vector<8x128xf32>, vector<128x128xf32>, vector<8x128xf32> -> vector<8x128xf32>
      %c0_51 = arith.constant 0 : index
      %c0_52 = arith.constant 0 : index
      %58 = vector.load %arg17[%c0_51, %c0_52] : memref<1x128xf32, #tpu.memory_space<vmem>>, vector<1x128xf32>
      %59 = vector.broadcast %58 : vector<1x128xf32> to vector<8x128xf32>
      %60 = arith.addf %57, %59 : vector<8x128xf32>
      %c0_53 = arith.constant 0 : index
      %c0_54 = arith.constant 0 : index
      %61 = vector.load %arg18[%c0_53, %c0_54] : memref<8x128xf32, #tpu.memory_space<vmem>>, vector<8x128xf32>
      tpu.vector_store %arg18[%c0_53, %c0_54], %41 {strides = array<i32>} : memref<8x128xf32, #tpu.memory_space<vmem>>, vector<8x128xf32>,
      %c0_55 = arith.constant 0 : index
      %c0_56 = arith.constant 0 : index
      %62 = vector.load %arg19[%c0_55, %c0_56] : memref<8x128xf32, #tpu.memory_space<vmem>>, vector<8x128xf32>
      tpu.vector_store %arg19[%c0_55, %c0_56], %60 {strides = array<i32>} : memref<8x128xf32, #tpu.memory_space<vmem>>, vector<8x128xf32>,
    } else {
    }
    return
  }
  func.func @transform_0(%arg0: i32) -> (i32, i32) {
    %c0_i32 = arith.constant 0 : i32
    %c0_i32_0 = arith.constant 0 : i32
    %c0_i32_1 = arith.constant 0 : i32
    return %c0_i32, %c0_i32_0 : i32, i32
  }
  func.func @transform_1(%arg0: i32) -> (i32, i32) {
    %c0_i32 = arith.constant 0 : i32
    %c0_i32_0 = arith.constant 0 : i32
    %c0_i32_1 = arith.constant 0 : i32
    return %c0_i32, %c0_i32_0 : i32, i32
  }
  func.func @transform_2(%arg0: i32) -> (i32, i32) {
    %c0_i32 = arith.constant 0 : i32
    %c0_i32_0 = arith.constant 0 : i32
    %c0_i32_1 = arith.constant 0 : i32
    return %c0_i32, %c0_i32_0 : i32, i32
  }
  func.func @transform_3(%arg0: i32) -> (i32, i32, i32) {
    %c0_i32 = arith.constant 0 : i32
    %c0_i32_0 = arith.constant 0 : i32
    %c0_i32_1 = arith.constant 0 : i32
    return %arg0, %c0_i32, %c0_i32_0 : i32, i32, i32
  }
  func.func @transform_4(%arg0: i32) -> (i32, i32, i32) {
    %c0_i32 = arith.constant 0 : i32
    %c0_i32_0 = arith.constant 0 : i32
    %c0_i32_1 = arith.constant 0 : i32
    return %arg0, %c0_i32, %c0_i32_0 : i32, i32, i32
  }
  func.func @transform_5(%arg0: i32) -> (i32, i32, i32) {
    %c0_i32 = arith.constant 0 : i32
    %c0_i32_0 = arith.constant 0 : i32
    %c0_i32_1 = arith.constant 0 : i32
    return %arg0, %c0_i32, %c0_i32_0 : i32, i32, i32
  }
  func.func @transform_6(%arg0: i32) -> (i32, i32, i32) {
    %c0_i32 = arith.constant 0 : i32
    %c0_i32_0 = arith.constant 0 : i32
    %c0_i32_1 = arith.constant 0 : i32
    return %arg0, %c0_i32, %c0_i32_0 : i32, i32, i32
  }
  func.func @transform_7(%arg0: i32) -> (i32, i32, i32) {
    %c0_i32 = arith.constant 0 : i32
    %c0_i32_0 = arith.constant 0 : i32
    %c0_i32_1 = arith.constant 0 : i32
    return %arg0, %c0_i32, %c0_i32_0 : i32, i32, i32
  }
  func.func @transform_8(%arg0: i32) -> (i32, i32) {
    %c0_i32 = arith.constant 0 : i32
    %c0_i32_0 = arith.constant 0 : i32
    %c0_i32_1 = arith.constant 0 : i32
    return %c0_i32, %c0_i32_0 : i32, i32
  }
  func.func @transform_9(%arg0: i32) -> (i32, i32) {
    %c0_i32 = arith.constant 0 : i32
    %c0_i32_0 = arith.constant 0 : i32
    %c0_i32_1 = arith.constant 0 : i32
    return %c0_i32, %c0_i32_0 : i32, i32
  }
  func.func @transform_10(%arg0: i32) -> (i32, i32) {
    %c0_i32 = arith.constant 0 : i32
    %c0_i32_0 = arith.constant 0 : i32
    %c0_i32_1 = arith.constant 0 : i32
    return %c0_i32, %c0_i32_0 : i32, i32
  }
  func.func @transform_11(%arg0: i32) -> (i32, i32) {
    %c0_i32 = arith.constant 0 : i32
    %c0_i32_0 = arith.constant 0 : i32
    %c0_i32_1 = arith.constant 0 : i32
    return %c0_i32, %c0_i32_0 : i32, i32
  }
  func.func @transform_12(%arg0: i32) -> (i32, i32) {
    %c0_i32 = arith.constant 0 : i32
    %c0_i32_0 = arith.constant 0 : i32
    %c0_i32_1 = arith.constant 0 : i32
    return %c0_i32, %c0_i32_0 : i32, i32
  }
  func.func @transform_13(%arg0: i32) -> (i32, i32) {
    %c0_i32 = arith.constant 0 : i32
    %c0_i32_0 = arith.constant 0 : i32
    %c0_i32_1 = arith.constant 0 : i32
    return %c0_i32, %c0_i32_0 : i32, i32
  }
  func.func @transform_14(%arg0: i32) -> (i32, i32) {
    %c0_i32 = arith.constant 0 : i32
    %c0_i32_0 = arith.constant 0 : i32
    %c0_i32_1 = arith.constant 0 : i32
    return %c0_i32, %c0_i32_0 : i32, i32
  }
  func.func @transform_15(%arg0: i32) -> (i32, i32) {
    %c0_i32 = arith.constant 0 : i32
    %c0_i32_0 = arith.constant 0 : i32
    %c0_i32_1 = arith.constant 0 : i32
    return %c0_i32, %c0_i32_0 : i32, i32
  }
  func.func @transform_16(%arg0: i32) -> (i32, i32) {
    %c0_i32 = arith.constant 0 : i32
    %c0_i32_0 = arith.constant 0 : i32
    %c0_i32_1 = arith.constant 0 : i32
    return %c0_i32, %c0_i32_0 : i32, i32
  }
  func.func @transform_17(%arg0: i32) -> (i32, i32) {
    %c0_i32 = arith.constant 0 : i32
    %c0_i32_0 = arith.constant 0 : i32
    %c0_i32_1 = arith.constant 0 : i32
    return %c0_i32, %c0_i32_0 : i32, i32
  }
  func.func @transform_18(%arg0: i32) -> (i32, i32) {
    %c0_i32 = arith.constant 0 : i32
    %c0_i32_0 = arith.constant 0 : i32
    %c0_i32_1 = arith.constant 0 : i32
    return %c0_i32, %c0_i32_0 : i32, i32
  }
}

</mosaic_0001>

<llo_original>
// kernel: tpu_custom_call.1
$region0: #{tpu_custom_call.1}
  #allocation0 [shape = 'u32[]', space=smem, size = 0x4, offset = 0x4, fixed_abs, tag = 'smem constant byte address 0x4 - core index']
  #allocation1 [shape = 'u32[144,128]{1,0:T(1,128)}', space=vmem, size = 0x12000, scoped, tag = 'internal scratch']
  #allocation2 [shape = 'bf16[128,128]{1,0:T(16,128)(2,1)}', space=vmem, size = 0x8000, scoped, tag = 'scratch operand']
  %s0 = inlined_call_operand.vmem [shape: bf16[128,128], index: 0, kind: input, shape index: {}]
  %s1 = inlined_call_operand.hbm [shape: bf16[128,128], index: 1, kind: input, shape index: {}]
  %s2 = inlined_call_operand.vmem [shape: bf16[128,8], index: 2, kind: input, shape index: {}]
  %s3 = inlined_call_operand.vmem [shape: bf16[3,8,128], index: 3, kind: input, shape index: {}]
  %s4 = inlined_call_operand.hbm [shape: bf16[3,128,128], index: 4, kind: input, shape index: {}]
  %s5 = inlined_call_operand.hbm [shape: f32[3,1,128], index: 5, kind: input, shape index: {}]
  %s6 = inlined_call_operand.hbm [shape: bf16[3,128,128], index: 6, kind: input, shape index: {}]
  %s7 = inlined_call_operand.vmem [shape: f32[3,1,128], index: 7, kind: input, shape index: {}]
  %s8 = inlined_call_operand.vmem [shape: f32[8,128], index: 8, kind: input, shape index: {}]
  %s9 = inlined_call_operand.hbm [shape: f32[128,128], index: 9, kind: input, shape index: {}]
  %s10 = inlined_call_operand.vmem [shape: f32[1,128], index: 10, kind: input, shape index: {}]
  %s11 = inlined_call_operand.hbm [shape: f32[128,128], index: 11, kind: input, shape index: {}]
  %s12 = inlined_call_operand.vmem [shape: f32[1,128], index: 12, kind: input, shape index: {}]
  %s13 = inlined_call_operand.hbm [shape: f32[128,128], index: 13, kind: input, shape index: {}]
  %s14 = inlined_call_operand.vmem [shape: f32[1,128], index: 14, kind: input, shape index: {}]
  %s15 = inlined_call_operand.hbm [shape: f32[128,128], index: 15, kind: input, shape index: {}]
  %s16 = inlined_call_operand.vmem [shape: f32[1,128], index: 16, kind: input, shape index: {}]
  %s17 = inlined_call_operand.hbm [shape: f32[8,128], index: 17, kind: output, shape index: {0}]
  %s18 = inlined_call_operand.hbm [shape: f32[8,128], index: 18, kind: output, shape index: {1}]
  %19 = xla_tuple %s17, %s18
  %s20 = sld [smem:[#allocation0]]
  $region153: #{tpu_custom_call.1} parent=0
    _
  %s22 = ssub.s32 1, %s20
  %s23 = scalar_select 0, %s22, %s20
  $region1: #{tpu_custom_call.1} parent=0
    #allocation3 [shape = 'u8[32768]{0}', space=vmem, size = 0x8000, scoped, tag = 'input window, operand 1, single buffered']
    #allocation4 [shape = 's32[2]{0}', space=sflag, size = 0x8, scoped, tag = 'scoped memory for tpu_custom_call.1']
    #allocation5 [shape = 's32[2]{0}', space=sflag, size = 0x8, scoped, tag = 'scoped memory for tpu_custom_call.1']
    #allocation6 [shape = 'u8[65536]{0}', space=vmem, size = 0x10000, scoped, tag = 'input window, operand 4']
    #allocation7 [shape = 's32[2]{0}', space=sflag, size = 0x8, scoped, tag = 'scoped memory for tpu_custom_call.1']
    #allocation8 [shape = 'u8[1024]{0}', space=vmem, size = 0x400, scoped, tag = 'input window, operand 5']
    #allocation9 [shape = 'u8[65536]{0}', space=vmem, size = 0x10000, scoped, tag = 'input window, operand 6']
    #allocation10 [shape = 's32[2]{0}', space=sflag, size = 0x8, scoped, tag = 'scoped memory for tpu_custom_call.1']
    #allocation11 [shape = 'u8[65536]{0}', space=vmem, size = 0x10000, scoped, tag = 'input window, operand 9, single buffered']
    #allocation12 [shape = 'u8[65536]{0}', space=vmem, size = 0x10000, scoped, tag = 'input window, operand 11, single buffered']
    #allocation13 [shape = 's32[1]{0}', space=sflag, size = 0x4, scoped, tag = 'scoped memory for tpu_custom_call.1']
    #allocation14 [shape = 'u8[65536]{0}', space=vmem, size = 0x10000, scoped, tag = 'input window, operand 13, single buffered']
    #allocation15 [shape = 'u8[65536]{0}', space=vmem, size = 0x10000, scoped, tag = 'input window, operand 15, single buffered']
    #allocation16 [shape = 's32[1]{0}', space=sflag, size = 0x4, scoped, tag = 'scoped memory for tpu_custom_call.1']
    #allocation17 [shape = 'u8[4096]{0}', space=vmem, size = 0x1000, scoped, tag = 'output window, operand 0, single buffered']
    #allocation18 [shape = 'u8[4096]{0}', space=vmem, size = 0x1000, scoped, tag = 'output window, operand 1, single buffered']
    #allocation19 [shape = 's32[1]{0}', space=sflag, size = 0x4, scoped, tag = 'scoped memory for tpu_custom_call.1']
    %24 = vsyncpa [#allocation4], 0
    %25 = vsyncpa [#allocation7], 0
    %s26 = scalar_lea.sflag [#allocation7], 1
    %27 = vsyncpa %s26, 0
    %28 = vsyncpa [#allocation10], 0
    %s29 = scalar_lea.sflag [#allocation10], 1
    %30 = vsyncpa %s29, 0
    %31 = vsyncpa [#allocation13], 0
    %32 = vsyncpa [#allocation16], 0
    %33 = vsyncpa [#allocation5], 0
    %34 = vsyncpa [#allocation19], 0
    loop: start=0, step=1, limit=5
    $region2: #{tpu_custom_call.1} parent=1 // loop_pre_header
      _
    $region3: #{tpu_custom_call.1} parent=1 // loop_header
      %s36 = sphi 0, %s40
      %p37 = scmp.ge.s32.totalorder %s36, 5
      %s44 = sphi 0, %s44
      %s46 = sphi 0, %s44
      %s47 = sphi 0, %s46
      %s61 = sphi 0, %s47
      %s65 = sphi 0, %s65
      %s67 = sphi 0, %s65
      %s68 = sphi 0, %s67
      %s82 = sphi 0, %s68
      %s86 = sphi 0, %s86
      %s88 = sphi 0, %s86
      %s89 = sphi 0, %s88
      %s103 = sphi 0, %s89
      %s109 = sphi 0, %s111
      %s112 = sphi 0, %s109
      %s113 = sphi 0, %s112
      %s129 = sphi 0, %s113
      %s135 = sphi 0, %s137
      %s138 = sphi 0, %s135
      %s139 = sphi 0, %s138
      %s155 = sphi 0, %s139
      %s161 = sphi 0, %s163
      %s164 = sphi 0, %s161
      %s165 = sphi 0, %s164
      %s181 = sphi 0, %s165
      %s187 = sphi 0, %s189
      %s190 = sphi 0, %s187
      %s191 = sphi 0, %s190
      %s207 = sphi 0, %s191
      %s213 = sphi 0, %s215
      %s216 = sphi 0, %s213
      %s217 = sphi 0, %s216
      %s233 = sphi 0, %s217
      %s237 = sphi 0, %s237
      %s239 = sphi 0, %s237
      %s240 = sphi 0, %s239
      %s254 = sphi 0, %s240
      %s258 = sphi 0, %s258
      %s260 = sphi 0, %s258
      %s261 = sphi 0, %s260
      %s275 = sphi 0, %s261
      %s279 = sphi 0, %s279
      %s281 = sphi 0, %s279
      %s282 = sphi 0, %s281
      %s296 = sphi 0, %s282
      %s300 = sphi 0, %s300
      %s302 = sphi 0, %s300
      %s303 = sphi 0, %s302
      %s317 = sphi 0, %s303
      %s321 = sphi 0, %s321
      %s323 = sphi 0, %s321
      %s324 = sphi 0, %s323
      %s338 = sphi 0, %s324
      %s342 = sphi 0, %s342
      %s344 = sphi 0, %s342
      %s345 = sphi 0, %s344
      %s359 = sphi 0, %s345
      %s363 = sphi 0, %s363
      %s365 = sphi 0, %s363
      %s366 = sphi 0, %s365
      %s380 = sphi 0, %s366
      %s384 = sphi 0, %s384
      %s386 = sphi 0, %s384
      %s387 = sphi 0, %s386
      %s401 = sphi 0, %s387
      %s405 = sphi 0, %s405
      %s407 = sphi 0, %s405
      %s408 = sphi 0, %s407
      %s422 = sphi 0, %s408
      %s426 = sphi 0, %s426
      %s428 = sphi 0, %s426
      %s429 = sphi 0, %s428
      %s443 = sphi 0, %s429
      %s447 = sphi 0, %s447
      %s449 = sphi 0, %s447
      %s450 = sphi 0, %s449
      %s464 = sphi 0, %s450
    $region4: #{tpu_custom_call.1} parent=1 // loop_header_branch
      %39 = sbr.rel (%p37) target = $region8
    $region5: #{tpu_custom_call.1} parent=1 // loop_body
      %s41 = ssub.s32 %s36, 1
      %s42 = ssub.s32 %s36, 2
      %s43 = sadd.s32 %s36, 1
      %s45 = sadd.s32 %s44, 1
      %p48 = scmp.eq.s32.totalorder %s36, 2
      %p49 = scmp.ne.s32.totalorder %s44, %s46
      %p50 = scmp.eq.s32.totalorder %s36, 0
      %p51 = por %p49, %p50
      %p52 = scmp.ne.s32.totalorder %s44, %s46
      %p53 = scmp.eq.s32.totalorder %s41, 2
      %p54 = por %p52, %p53
      %p55 = scmp.ne.s32.totalorder %s46, %s47
      %p56 = scmp.eq.s32.totalorder %s41, 0
      %p57 = por %p55, %p56
      %p58 = scmp.ne.s32.totalorder %s46, %s47
      %p59 = scmp.eq.s32.totalorder %s42, 2
      %p60 = por %p58, %p59
      %p62 = scmp.ne.s32.totalorder %s47, %s61
      %p63 = scmp.eq.s32.totalorder %s42, 0
      %p64 = por %p62, %p63
      %s66 = sadd.s32 %s65, 1
      %p69 = scmp.eq.s32.totalorder %s36, 2
      %p70 = scmp.ne.s32.totalorder %s65, %s67
      %p71 = scmp.eq.s32.totalorder %s36, 0
      %p72 = por %p70, %p71
      %p73 = scmp.ne.s32.totalorder %s65, %s67
      %p74 = scmp.eq.s32.totalorder %s41, 2
      %p75 = por %p73, %p74
      %p76 = scmp.ne.s32.totalorder %s67, %s68
      %p77 = scmp.eq.s32.totalorder %s41, 0
      %p78 = por %p76, %p77
      %p79 = scmp.ne.s32.totalorder %s67, %s68
      %p80 = scmp.eq.s32.totalorder %s42, 2
      %p81 = por %p79, %p80
      %p83 = scmp.ne.s32.totalorder %s68, %s82
      %p84 = scmp.eq.s32.totalorder %s42, 0
      %p85 = por %p83, %p84
      %s87 = sadd.s32 %s86, 1
      %p90 = scmp.eq.s32.totalorder %s36, 2
      %p91 = scmp.ne.s32.totalorder %s86, %s88
      %p92 = scmp.eq.s32.totalorder %s36, 0
      %p93 = por %p91, %p92
      %p94 = scmp.ne.s32.totalorder %s86, %s88
      %p95 = scmp.eq.s32.totalorder %s41, 2
      %p96 = por %p94, %p95
      %p97 = scmp.ne.s32.totalorder %s88, %s89
      %p98 = scmp.eq.s32.totalorder %s41, 0
      %p99 = por %p97, %p98
      %p100 = scmp.ne.s32.totalorder %s88, %s89
      %p101 = scmp.eq.s32.totalorder %s42, 2
      %p102 = por %p100, %p101
      %p104 = scmp.ne.s32.totalorder %s89, %s103
      %p105 = scmp.eq.s32.totalorder %s42, 0
      %p106 = por %p104, %p105
      %s107 = ssub.s32 %s36, %s43
      %p108 = scmp.eq.s32.totalorder %s107, 0
      %s110 = sadd.s32 %s109, 1
      %s111 = scalar_select %p108, %s109, %s110
      %p114 = pneg %p108
      %p115 = scmp.eq.s32.totalorder %s36, 2
      %p116 = por %p114, %p115
      %p117 = scmp.ne.s32.totalorder %s109, %s112
      %p118 = scmp.eq.s32.totalorder %s36, 0
      %p119 = por %p117, %p118
      %p120 = scmp.ne.s32.totalorder %s109, %s112
      %p121 = scmp.eq.s32.totalorder %s41, 2
      %p122 = por %p120, %p121
      %p123 = scmp.ne.s32.totalorder %s112, %s113
      %p124 = scmp.eq.s32.totalorder %s41, 0
      %p125 = por %p123, %p124
      %p126 = scmp.ne.s32.totalorder %s112, %s113
      %p127 = scmp.eq.s32.totalorder %s42, 2
      %p128 = por %p126, %p127
      %p130 = scmp.ne.s32.totalorder %s113, %s129
      %p131 = scmp.eq.s32.totalorder %s42, 0
      %p132 = por %p130, %p131
      %s133 = ssub.s32 %s36, %s43
      %p134 = scmp.eq.s32.totalorder %s133, 0
      %s136 = sadd.s32 %s135, 1
      %s137 = scalar_select %p134, %s135, %s136
      %p140 = pneg %p134
      %p141 = scmp.eq.s32.totalorder %s36, 2
      %p142 = por %p140, %p141
      %p143 = scmp.ne.s32.totalorder %s135, %s138
      %p144 = scmp.eq.s32.totalorder %s36, 0
      %p145 = por %p143, %p144
      %p146 = scmp.ne.s32.totalorder %s135, %s138
      %p147 = scmp.eq.s32.totalorder %s41, 2
      %p148 = por %p146, %p147
      %p149 = scmp.ne.s32.totalorder %s138, %s139
      %p150 = scmp.eq.s32.totalorder %s41, 0
      %p151 = por %p149, %p150
      %p152 = scmp.ne.s32.totalorder %s138, %s139
      %p153 = scmp.eq.s32.totalorder %s42, 2
      %p154 = por %p152, %p153
      %p156 = scmp.ne.s32.totalorder %s139, %s155
      %p157 = scmp.eq.s32.totalorder %s42, 0
      %p158 = por %p156, %p157
      %s159 = ssub.s32 %s36, %s43
      %p160 = scmp.eq.s32.totalorder %s159, 0
      %s162 = sadd.s32 %s161, 1
      %s163 = scalar_select %p160, %s161, %s162
      %p166 = pneg %p160
      %p167 = scmp.eq.s32.totalorder %s36, 2
      %p168 = por %p166, %p167
      %p169 = scmp.ne.s32.totalorder %s161, %s164
      %p170 = scmp.eq.s32.totalorder %s36, 0
      %p171 = por %p169, %p170
      %p172 = scmp.ne.s32.totalorder %s161, %s164
      %p173 = scmp.eq.s32.totalorder %s41, 2
      %p174 = por %p172, %p173
      %p175 = scmp.ne.s32.totalorder %s164, %s165
      %p176 = scmp.eq.s32.totalorder %s41, 0
      %p177 = por %p175, %p176
      %p178 = scmp.ne.s32.totalorder %s164, %s165
      %p179 = scmp.eq.s32.totalorder %s42, 2
      %p180 = por %p178, %p179
      %p182 = scmp.ne.s32.totalorder %s165, %s181
      %p183 = scmp.eq.s32.totalorder %s42, 0
      %p184 = por %p182, %p183
      %s185 = ssub.s32 %s36, %s43
      %p186 = scmp.eq.s32.totalorder %s185, 0
      %s188 = sadd.s32 %s187, 1
      %s189 = scalar_select %p186, %s187, %s188
      %p192 = pneg %p186
      %p193 = scmp.eq.s32.totalorder %s36, 2
      %p194 = por %p192, %p193
      %p195 = scmp.ne.s32.totalorder %s187, %s190
      %p196 = scmp.eq.s32.totalorder %s36, 0
      %p197 = por %p195, %p196
      %p198 = scmp.ne.s32.totalorder %s187, %s190
      %p199 = scmp.eq.s32.totalorder %s41, 2
      %p200 = por %p198, %p199
      %p201 = scmp.ne.s32.totalorder %s190, %s191
      %p202 = scmp.eq.s32.totalorder %s41, 0
      %p203 = por %p201, %p202
      %p204 = scmp.ne.s32.totalorder %s190, %s191
      %p205 = scmp.eq.s32.totalorder %s42, 2
      %p206 = por %p204, %p205
      %p208 = scmp.ne.s32.totalorder %s191, %s207
      %p209 = scmp.eq.s32.totalorder %s42, 0
      %p210 = por %p208, %p209
      %s211 = ssub.s32 %s36, %s43
      %p212 = scmp.eq.s32.totalorder %s211, 0
      %s214 = sadd.s32 %s213, 1
      %s215 = scalar_select %p212, %s213, %s214
      %p218 = pneg %p212
      %p219 = scmp.eq.s32.totalorder %s36, 2
      %p220 = por %p218, %p219
      %p221 = scmp.ne.s32.totalorder %s213, %s216
      %p222 = scmp.eq.s32.totalorder %s36, 0
      %p223 = por %p221, %p222
      %p224 = scmp.ne.s32.totalorder %s213, %s216
      %p225 = scmp.eq.s32.totalorder %s41, 2
      %p226 = por %p224, %p225
      %p227 = scmp.ne.s32.totalorder %s216, %s217
      %p228 = scmp.eq.s32.totalorder %s41, 0
      %p229 = por %p227, %p228
      %p230 = scmp.ne.s32.totalorder %s216, %s217
      %p231 = scmp.eq.s32.totalorder %s42, 2
      %p232 = por %p230, %p231
      %p234 = scmp.ne.s32.totalorder %s217, %s233
      %p235 = scmp.eq.s32.totalorder %s42, 0
      %p236 = por %p234, %p235
      %s238 = sadd.s32 %s237, 1
      %p241 = scmp.eq.s32.totalorder %s36, 2
      %p242 = scmp.ne.s32.totalorder %s237, %s239
      %p243 = scmp.eq.s32.totalorder %s36, 0
      %p244 = por %p242, %p243
      %p245 = scmp.ne.s32.totalorder %s237, %s239
      %p246 = scmp.eq.s32.totalorder %s41, 2
      %p247 = por %p245, %p246
      %p248 = scmp.ne.s32.totalorder %s239, %s240
      %p249 = scmp.eq.s32.totalorder %s41, 0
      %p250 = por %p248, %p249
      %p251 = scmp.ne.s32.totalorder %s239, %s240
      %p252 = scmp.eq.s32.totalorder %s42, 2
      %p253 = por %p251, %p252
      %p255 = scmp.ne.s32.totalorder %s240, %s254
      %p256 = scmp.eq.s32.totalorder %s42, 0
      %p257 = por %p255, %p256
      %s259 = sadd.s32 %s258, 1
      %p262 = scmp.eq.s32.totalorder %s36, 2
      %p263 = scmp.ne.s32.totalorder %s258, %s260
      %p264 = scmp.eq.s32.totalorder %s36, 0
      %p265 = por %p263, %p264
      %p266 = scmp.ne.s32.totalorder %s258, %s260
      %p267 = scmp.eq.s32.totalorder %s41, 2
      %p268 = por %p266, %p267
      %p269 = scmp.ne.s32.totalorder %s260, %s261
      %p270 = scmp.eq.s32.totalorder %s41, 0
      %p271 = por %p269, %p270
      %p272 = scmp.ne.s32.totalorder %s260, %s261
      %p273 = scmp.eq.s32.totalorder %s42, 2
      %p274 = por %p272, %p273
      %p276 = scmp.ne.s32.totalorder %s261, %s275
      %p277 = scmp.eq.s32.totalorder %s42, 0
      %p278 = por %p276, %p277
      %s280 = sadd.s32 %s279, 1
      %p283 = scmp.eq.s32.totalorder %s36, 2
      %p284 = scmp.ne.s32.totalorder %s279, %s281
      %p285 = scmp.eq.s32.totalorder %s36, 0
      %p286 = por %p284, %p285
      %p287 = scmp.ne.s32.totalorder %s279, %s281
      %p288 = scmp.eq.s32.totalorder %s41, 2
      %p289 = por %p287, %p288
      %p290 = scmp.ne.s32.totalorder %s281, %s282
      %p291 = scmp.eq.s32.totalorder %s41, 0
      %p292 = por %p290, %p291
      %p293 = scmp.ne.s32.totalorder %s281, %s282
      %p294 = scmp.eq.s32.totalorder %s42, 2
      %p295 = por %p293, %p294
      %p297 = scmp.ne.s32.totalorder %s282, %s296
      %p298 = scmp.eq.s32.totalorder %s42, 0
      %p299 = por %p297, %p298
      %s301 = sadd.s32 %s300, 1
      %p304 = scmp.eq.s32.totalorder %s36, 2
      %p305 = scmp.ne.s32.totalorder %s300, %s302
      %p306 = scmp.eq.s32.totalorder %s36, 0
      %p307 = por %p305, %p306
      %p308 = scmp.ne.s32.totalorder %s300, %s302
      %p309 = scmp.eq.s32.totalorder %s41, 2
      %p310 = por %p308, %p309
      %p311 = scmp.ne.s32.totalorder %s302, %s303
      %p312 = scmp.eq.s32.totalorder %s41, 0
      %p313 = por %p311, %p312
      %p314 = scmp.ne.s32.totalorder %s302, %s303
      %p315 = scmp.eq.s32.totalorder %s42, 2
      %p316 = por %p314, %p315
      %p318 = scmp.ne.s32.totalorder %s303, %s317
      %p319 = scmp.eq.s32.totalorder %s42, 0
      %p320 = por %p318, %p319
      %s322 = sadd.s32 %s321, 1
      %p325 = scmp.eq.s32.totalorder %s36, 2
      %p326 = scmp.ne.s32.totalorder %s321, %s323
      %p327 = scmp.eq.s32.totalorder %s36, 0
      %p328 = por %p326, %p327
      %p329 = scmp.ne.s32.totalorder %s321, %s323
      %p330 = scmp.eq.s32.totalorder %s41, 2
      %p331 = por %p329, %p330
      %p332 = scmp.ne.s32.totalorder %s323, %s324
      %p333 = scmp.eq.s32.totalorder %s41, 0
      %p334 = por %p332, %p333
      %p335 = scmp.ne.s32.totalorder %s323, %s324
      %p336 = scmp.eq.s32.totalorder %s42, 2
      %p337 = por %p335, %p336
      %p339 = scmp.ne.s32.totalorder %s324, %s338
      %p340 = scmp.eq.s32.totalorder %s42, 0
      %p341 = por %p339, %p340
      %s343 = sadd.s32 %s342, 1
      %p346 = scmp.eq.s32.totalorder %s36, 2
      %p347 = scmp.ne.s32.totalorder %s342, %s344
      %p348 = scmp.eq.s32.totalorder %s36, 0
      %p349 = por %p347, %p348
      %p350 = scmp.ne.s32.totalorder %s342, %s344
      %p351 = scmp.eq.s32.totalorder %s41, 2
      %p352 = por %p350, %p351
      %p353 = scmp.ne.s32.totalorder %s344, %s345
      %p354 = scmp.eq.s32.totalorder %s41, 0
      %p355 = por %p353, %p354
      %p356 = scmp.ne.s32.totalorder %s344, %s345
      %p357 = scmp.eq.s32.totalorder %s42, 2
      %p358 = por %p356, %p357
      %p360 = scmp.ne.s32.totalorder %s345, %s359
      %p361 = scmp.eq.s32.totalorder %s42, 0
      %p362 = por %p360, %p361
      %s364 = sadd.s32 %s363, 1
      %p367 = scmp.eq.s32.totalorder %s36, 2
      %p368 = scmp.ne.s32.totalorder %s363, %s365
      %p369 = scmp.eq.s32.totalorder %s36, 0
      %p370 = por %p368, %p369
      %p371 = scmp.ne.s32.totalorder %s363, %s365
      %p372 = scmp.eq.s32.totalorder %s41, 2
      %p373 = por %p371, %p372
      %p374 = scmp.ne.s32.totalorder %s365, %s366
      %p375 = scmp.eq.s32.totalorder %s41, 0
      %p376 = por %p374, %p375
      %p377 = scmp.ne.s32.totalorder %s365, %s366
      %p378 = scmp.eq.s32.totalorder %s42, 2
      %p379 = por %p377, %p378
      %p381 = scmp.ne.s32.totalorder %s366, %s380
      %p382 = scmp.eq.s32.totalorder %s42, 0
      %p383 = por %p381, %p382
      %s385 = sadd.s32 %s384, 1
      %p388 = scmp.eq.s32.totalorder %s36, 2
      %p389 = scmp.ne.s32.totalorder %s384, %s386
      %p390 = scmp.eq.s32.totalorder %s36, 0
      %p391 = por %p389, %p390
      %p392 = scmp.ne.s32.totalorder %s384, %s386
      %p393 = scmp.eq.s32.totalorder %s41, 2
      %p394 = por %p392, %p393
      %p395 = scmp.ne.s32.totalorder %s386, %s387
      %p396 = scmp.eq.s32.totalorder %s41, 0
      %p397 = por %p395, %p396
      %p398 = scmp.ne.s32.totalorder %s386, %s387
      %p399 = scmp.eq.s32.totalorder %s42, 2
      %p400 = por %p398, %p399
      %p402 = scmp.ne.s32.totalorder %s387, %s401
      %p403 = scmp.eq.s32.totalorder %s42, 0
      %p404 = por %p402, %p403
      %s406 = sadd.s32 %s405, 1
      %p409 = scmp.eq.s32.totalorder %s36, 2
      %p410 = scmp.ne.s32.totalorder %s405, %s407
      %p411 = scmp.eq.s32.totalorder %s36, 0
      %p412 = por %p410, %p411
      %p413 = scmp.ne.s32.totalorder %s405, %s407
      %p414 = scmp.eq.s32.totalorder %s41, 2
      %p415 = por %p413, %p414
      %p416 = scmp.ne.s32.totalorder %s407, %s408
      %p417 = scmp.eq.s32.totalorder %s41, 0
      %p418 = por %p416, %p417
      %p419 = scmp.ne.s32.totalorder %s407, %s408
      %p420 = scmp.eq.s32.totalorder %s42, 2
      %p421 = por %p419, %p420
      %p423 = scmp.ne.s32.totalorder %s408, %s422
      %p424 = scmp.eq.s32.totalorder %s42, 0
      %p425 = por %p423, %p424
      %s427 = sadd.s32 %s426, 1
      %p430 = scmp.eq.s32.totalorder %s36, 2
      %p431 = scmp.ne.s32.totalorder %s426, %s428
      %p432 = scmp.eq.s32.totalorder %s36, 0
      %p433 = por %p431, %p432
      %p434 = scmp.ne.s32.totalorder %s426, %s428
      %p435 = scmp.eq.s32.totalorder %s41, 2
      %p436 = por %p434, %p435
      %p437 = scmp.ne.s32.totalorder %s428, %s429
      %p438 = scmp.eq.s32.totalorder %s41, 0
      %p439 = por %p437, %p438
      %p440 = scmp.ne.s32.totalorder %s428, %s429
      %p441 = scmp.eq.s32.totalorder %s42, 2
      %p442 = por %p440, %p441
      %p444 = scmp.ne.s32.totalorder %s429, %s443
      %p445 = scmp.eq.s32.totalorder %s42, 0
      %p446 = por %p444, %p445
      %s448 = sadd.s32 %s447, 1
      %p451 = scmp.eq.s32.totalorder %s36, 2
      %p452 = scmp.ne.s32.totalorder %s447, %s449
      %p453 = scmp.eq.s32.totalorder %s36, 0
      %p454 = por %p452, %p453
      %p455 = scmp.ne.s32.totalorder %s447, %s449
      %p456 = scmp.eq.s32.totalorder %s41, 2
      %p457 = por %p455, %p456
      %p458 = scmp.ne.s32.totalorder %s449, %s450
      %p459 = scmp.eq.s32.totalorder %s41, 0
      %p460 = por %p458, %p459
      %p461 = scmp.ne.s32.totalorder %s449, %s450
      %p462 = scmp.eq.s32.totalorder %s42, 2
      %p463 = por %p461, %p462
      %p465 = scmp.ne.s32.totalorder %s450, %s464
      %p466 = scmp.eq.s32.totalorder %s42, 0
      %p467 = por %p465, %p466
      %p468 = scmp.le.s32.totalorder 1, %s36
      %p469 = scmp.lt.s32.totalorder %s36, 4
      %p470 = pnand %p468, %p469
      %p471 = pneg %p470
      // Predicated region
      $region9: #{tpu_custom_call.1} parent=5 // pred_check
        _
      $region10: #{tpu_custom_call.1} parent=5 // pred_check_branch
        %473 = sbr.rel (%p470) target = $region12
      $region11: #{tpu_custom_call.1} parent=5 // pred_region
        %s474 = ssub.s32 %s36, 1
        // Predicated region
        $region13: #{tpu_custom_call.1} parent=11 // pred_check
          %p475 = pneg %p57
        $region14: #{tpu_custom_call.1} parent=11 // pred_check_branch
          %477 = sbr.rel (%p475) target = $region16
        $region15: #{tpu_custom_call.1} parent=11 // pred_region
          _
        $region16: #{tpu_custom_call.1} parent=11 // pred_fallthru
          _
        // Predicated region
        $region17: #{tpu_custom_call.1} parent=11 // pred_check
          %p478 = pneg %p78
        $region18: #{tpu_custom_call.1} parent=11 // pred_check_branch
          %480 = sbr.rel (%p478) target = $region20
        $region19: #{tpu_custom_call.1} parent=11 // pred_region
          %s482 = ssub.s32 1024, 1024
          %483 = vsyncadd [#allocation4], %s482
          %s484 = sshll.u32 [#allocation3], 4
          %s485 = int_to_ptr.vmem [resolvable:$true] %s484
          %490 = dma.hbm_to_vmem [thread:$0]  %s1, 1024, %s485, [#allocation4], 64, 64, 4
        $region20: #{tpu_custom_call.1} parent=11 // pred_fallthru
          _
        // Predicated region
        $region21: #{tpu_custom_call.1} parent=11 // pred_check
          %p491 = pneg %p99
        $region22: #{tpu_custom_call.1} parent=11 // pred_check_branch
          %493 = sbr.rel (%p491) target = $region24
        $region23: #{tpu_custom_call.1} parent=11 // pred_region
          _
        $region24: #{tpu_custom_call.1} parent=11 // pred_fallthru
          _
        // Predicated region
        $region25: #{tpu_custom_call.1} parent=11 // pred_check
          %p494 = pneg %p250
        $region26: #{tpu_custom_call.1} parent=11 // pred_check_branch
          %496 = sbr.rel (%p494) target = $region28
        $region27: #{tpu_custom_call.1} parent=11 // pred_region
          _
        $region28: #{tpu_custom_call.1} parent=11 // pred_fallthru
          _
        // Predicated region
        $region29: #{tpu_custom_call.1} parent=11 // pred_check
          %p497 = pneg %p271
        $region30: #{tpu_custom_call.1} parent=11 // pred_check_branch
          %499 = sbr.rel (%p497) target = $region32
        $region31: #{tpu_custom_call.1} parent=11 // pred_region
          %s501 = ssub.s32 2048, 2048
          %502 = vsyncadd [#allocation10], %s501
          %s503 = sshll.u32 [#allocation11], 4
          %s504 = int_to_ptr.vmem [resolvable:$true] %s503
          %509 = dma.hbm_to_vmem [thread:$0]  %s9, 2048, %s504, [#allocation10], 128, 128, 8
        $region32: #{tpu_custom_call.1} parent=11 // pred_fallthru
          _
        // Predicated region
        $region33: #{tpu_custom_call.1} parent=11 // pred_check
          %p510 = pneg %p292
        $region34: #{tpu_custom_call.1} parent=11 // pred_check_branch
          %512 = sbr.rel (%p510) target = $region36
        $region35: #{tpu_custom_call.1} parent=11 // pred_region
          _
        $region36: #{tpu_custom_call.1} parent=11 // pred_fallthru
          _
        // Predicated region
        $region37: #{tpu_custom_call.1} parent=11 // pred_check
          %p513 = pneg %p313
        $region38: #{tpu_custom_call.1} parent=11 // pred_check_branch
          %515 = sbr.rel (%p513) target = $region40
        $region39: #{tpu_custom_call.1} parent=11 // pred_region
          %s517 = ssub.s32 2048, 2048
          %518 = vsyncadd [#allocation13], %s517
          %s519 = sshll.u32 [#allocation12], 4
          %s520 = int_to_ptr.vmem [resolvable:$true] %s519
          %525 = dma.hbm_to_vmem [thread:$0]  %s11, 2048, %s520, [#allocation13], 128, 128, 8
        $region40: #{tpu_custom_call.1} parent=11 // pred_fallthru
          _
        // Predicated region
        $region41: #{tpu_custom_call.1} parent=11 // pred_check
          %p526 = pneg %p334
        $region42: #{tpu_custom_call.1} parent=11 // pred_check_branch
          %528 = sbr.rel (%p526) target = $region44
        $region43: #{tpu_custom_call.1} parent=11 // pred_region
          _
        $region44: #{tpu_custom_call.1} parent=11 // pred_fallthru
          _
        // Predicated region
        $region45: #{tpu_custom_call.1} parent=11 // pred_check
          %p529 = pneg %p355
        $region46: #{tpu_custom_call.1} parent=11 // pred_check_branch
          %531 = sbr.rel (%p529) target = $region48
        $region47: #{tpu_custom_call.1} parent=11 // pred_region
          %s533 = ssub.s32 2048, 2048
          %534 = vsyncadd [#allocation13], %s533
          %s535 = sshll.u32 [#allocation14], 4
          %s536 = int_to_ptr.vmem [resolvable:$true] %s535
          %541 = dma.hbm_to_vmem [thread:$0]  %s13, 2048, %s536, [#allocation13], 128, 128, 8
        $region48: #{tpu_custom_call.1} parent=11 // pred_fallthru
          _
        // Predicated region
        $region49: #{tpu_custom_call.1} parent=11 // pred_check
          %p542 = pneg %p376
        $region50: #{tpu_custom_call.1} parent=11 // pred_check_branch
          %544 = sbr.rel (%p542) target = $region52
        $region51: #{tpu_custom_call.1} parent=11 // pred_region
          _
        $region52: #{tpu_custom_call.1} parent=11 // pred_fallthru
          _
        // Predicated region
        $region53: #{tpu_custom_call.1} parent=11 // pred_check
          %p545 = pneg %p397
        $region54: #{tpu_custom_call.1} parent=11 // pred_check_branch
          %547 = sbr.rel (%p545) target = $region56
        $region55: #{tpu_custom_call.1} parent=11 // pred_region
          %s549 = ssub.s32 2048, 2048
          %550 = vsyncadd [#allocation16], %s549
          %s551 = sshll.u32 [#allocation15], 4
          %s552 = int_to_ptr.vmem [resolvable:$true] %s551
          %557 = dma.hbm_to_vmem [thread:$0]  %s15, 2048, %s552, [#allocation16], 128, 128, 8
        $region56: #{tpu_custom_call.1} parent=11 // pred_fallthru
          _
        // Predicated region
        $region57: #{tpu_custom_call.1} parent=11 // pred_check
          %p558 = pneg %p418
        $region58: #{tpu_custom_call.1} parent=11 // pred_check_branch
          %560 = sbr.rel (%p558) target = $region60
        $region59: #{tpu_custom_call.1} parent=11 // pred_region
          _
        $region60: #{tpu_custom_call.1} parent=11 // pred_fallthru
          _
      $region12: #{tpu_custom_call.1} parent=5 // pred_fallthru
        _
      %p561 = scmp.lt.s32.totalorder %s36, 3
      // Predicated region
      $region61: #{tpu_custom_call.1} parent=5 // pred_check
        %p562 = pneg %p561
      $region62: #{tpu_custom_call.1} parent=5 // pred_check_branch
        %564 = sbr.rel (%p562) target = $region64
      $region63: #{tpu_custom_call.1} parent=5 // pred_region
        // Predicated region
        $region65: #{tpu_custom_call.1} parent=63 // pred_check
          %p565 = pneg %p119
        $region66: #{tpu_custom_call.1} parent=63 // pred_check_branch
          %567 = sbr.rel (%p565) target = $region68
        $region67: #{tpu_custom_call.1} parent=63 // pred_region
          %p568 = scmp.lt.s32.totalorder %s36, 2
          %s569 = scalar_select %p568, %s36, 2
          %s570 = smul.addr %s569, 4
          %s571 = scalar_lea.vmem %s3, %s570
        $region68: #{tpu_custom_call.1} parent=63 // pred_fallthru
          _
        // Predicated region
        $region69: #{tpu_custom_call.1} parent=63 // pred_check
          %p572 = pneg %p145
        $region70: #{tpu_custom_call.1} parent=63 // pred_check_branch
          %574 = sbr.rel (%p572) target = $region72
        $region71: #{tpu_custom_call.1} parent=63 // pred_region
          %s575 = sand.u32 %s36, 1
          %s576 = scalar_lea.sflag [#allocation7], %s575
          %s577 = sand.u32 %s135, 1
          %s578 = smul.addr %s577, 64
          %s579 = scalar_lea.vmem [#allocation6], %s578
          %s581 = ssub.s32 1024, 1024
          %582 = vsyncadd %s576, %s581
          %s583 = smul.addr %s36, 16
          %s584 = smul.addr %s583, 64
          %s585 = scalar_lea.hbm %s4, %s584
          %s586 = sshll.u32 %s579, 4
          %s587 = int_to_ptr.vmem [resolvable:$true] %s586
          %592 = dma.hbm_to_vmem [thread:$0]  %s585, 1024, %s587, %s576, 64, 64, 4
        $region72: #{tpu_custom_call.1} parent=63 // pred_fallthru
          _
        // Predicated region
        $region73: #{tpu_custom_call.1} parent=63 // pred_check
          %p593 = pneg %p171
        $region74: #{tpu_custom_call.1} parent=63 // pred_check_branch
          %595 = sbr.rel (%p593) target = $region76
        $region75: #{tpu_custom_call.1} parent=63 // pred_region
          %s596 = sand.u32 %s36, 1
          %s597 = scalar_lea.sflag [#allocation7], %s596
          %s598 = sand.u32 %s161, 1
          %s599 = scalar_lea.vmem [#allocation8], %s598
          %s601 = ssub.s32 16, 16
          %602 = vsyncadd %s597, %s601
          %s603 = smul.addr %s36, 16
          %s604 = scalar_lea.hbm %s5, %s603
          %s606 = sshll.u32 %s599, 4
          %s607 = int_to_ptr.vmem [resolvable:$true] %s606
          %609 = dma.hbm_to_vmem [thread:$0]  %s604, 16, %s607, %s597
        $region76: #{tpu_custom_call.1} parent=63 // pred_fallthru
          _
        // Predicated region
        $region77: #{tpu_custom_call.1} parent=63 // pred_check
          %p610 = pneg %p197
        $region78: #{tpu_custom_call.1} parent=63 // pred_check_branch
          %612 = sbr.rel (%p610) target = $region80
        $region79: #{tpu_custom_call.1} parent=63 // pred_region
          %s613 = sand.u32 %s36, 1
          %s614 = scalar_lea.sflag [#allocation10], %s613
          %s615 = sand.u32 %s187, 1
          %s616 = smul.addr %s615, 64
          %s617 = scalar_lea.vmem [#allocation9], %s616
          %s619 = ssub.s32 1024, 1024
          %620 = vsyncadd %s614, %s619
          %s621 = smul.addr %s36, 16
          %s622 = smul.addr %s621, 64
          %s623 = scalar_lea.hbm %s6, %s622
          %s624 = sshll.u32 %s617, 4
          %s625 = int_to_ptr.vmem [resolvable:$true] %s624
          %630 = dma.hbm_to_vmem [thread:$0]  %s623, 1024, %s625, %s614, 64, 64, 4
        $region80: #{tpu_custom_call.1} parent=63 // pred_fallthru
          _
        // Predicated region
        $region81: #{tpu_custom_call.1} parent=63 // pred_check
          %p631 = pneg %p223
        $region82: #{tpu_custom_call.1} parent=63 // pred_check_branch
          %633 = sbr.rel (%p631) target = $region84
        $region83: #{tpu_custom_call.1} parent=63 // pred_region
          %p634 = scmp.lt.s32.totalorder %s36, 2
          %s635 = scalar_select %p634, %s36, 2
          %s636 = scalar_lea.vmem %s7, %s635
        $region84: #{tpu_custom_call.1} parent=63 // pred_fallthru
          _
      $region64: #{tpu_custom_call.1} parent=5 // pred_fallthru
        _
      %p637 = scmp.le.s32.totalorder 1, %s36
      %p638 = scmp.lt.s32.totalorder %s36, 4
      %p639 = pnand %p637, %p638
      %p640 = pneg %p639
      // Predicated region
      $region85: #{tpu_custom_call.1} parent=5 // pred_check
        _
      $region86: #{tpu_custom_call.1} parent=5 // pred_check_branch
        %642 = sbr.rel (%p639) target = $region88
      $region87: #{tpu_custom_call.1} parent=5 // pred_region
        %s643 = ssub.s32 %s36, 1
        // Predicated region
        $region89: #{tpu_custom_call.1} parent=87 // pred_check
          %p644 = pneg %p78
        $region90: #{tpu_custom_call.1} parent=87 // pred_check_branch
          %646 = sbr.rel (%p644) target = $region92
        $region91: #{tpu_custom_call.1} parent=87 // pred_region
          %647 = dma.done [#allocation4], 1024
        $region92: #{tpu_custom_call.1} parent=87 // pred_fallthru
          _
        %s648 = sand.u32 %s41, 1
        %s649 = scalar_lea.sflag [#allocation7], %s648
        %s650 = sand.u32 %s138, 1
        %s651 = smul.addr %s650, 64
        %s652 = scalar_lea.vmem [#allocation6], %s651
        // Predicated region
        $region93: #{tpu_custom_call.1} parent=87 // pred_check
          %p653 = pneg %p151
        $region94: #{tpu_custom_call.1} parent=87 // pred_check_branch
          %655 = sbr.rel (%p653) target = $region96
        $region95: #{tpu_custom_call.1} parent=87 // pred_region
          %656 = dma.done %s649, 1024
        $region96: #{tpu_custom_call.1} parent=87 // pred_fallthru
          _
        %s657 = sand.u32 %s41, 1
        %s658 = scalar_lea.sflag [#allocation7], %s657
        %s659 = sand.u32 %s164, 1
        %s660 = scalar_lea.vmem [#allocation8], %s659
        // Predicated region
        $region97: #{tpu_custom_call.1} parent=87 // pred_check
          %p661 = pneg %p177
        $region98: #{tpu_custom_call.1} parent=87 // pred_check_branch
          %663 = sbr.rel (%p661) target = $region100
        $region99: #{tpu_custom_call.1} parent=87 // pred_region
          %664 = dma.done %s658, 16
        $region100: #{tpu_custom_call.1} parent=87 // pred_fallthru
          _
        %s665 = sand.u32 %s41, 1
        %s666 = scalar_lea.sflag [#allocation10], %s665
        %s667 = sand.u32 %s190, 1
        %s668 = smul.addr %s667, 64
        %s669 = scalar_lea.vmem [#allocation9], %s668
        // Predicated region
        $region101: #{tpu_custom_call.1} parent=87 // pred_check
          %p670 = pneg %p203
        $region102: #{tpu_custom_call.1} parent=87 // pred_check_branch
          %672 = sbr.rel (%p670) target = $region104
        $region103: #{tpu_custom_call.1} parent=87 // pred_region
          %673 = dma.done %s666, 1024
        $region104: #{tpu_custom_call.1} parent=87 // pred_fallthru
          _
        // Predicated region
        $region105: #{tpu_custom_call.1} parent=87 // pred_check
          %p674 = pneg %p271
        $region106: #{tpu_custom_call.1} parent=87 // pred_check_branch
          %676 = sbr.rel (%p674) target = $region108
        $region107: #{tpu_custom_call.1} parent=87 // pred_region
          %677 = dma.done [#allocation10], 2048
        $region108: #{tpu_custom_call.1} parent=87 // pred_fallthru
          _
        // Predicated region
        $region109: #{tpu_custom_call.1} parent=87 // pred_check
          %p678 = pneg %p313
        $region110: #{tpu_custom_call.1} parent=87 // pred_check_branch
          %680 = sbr.rel (%p678) target = $region112
        $region111: #{tpu_custom_call.1} parent=87 // pred_region
          %681 = dma.done [#allocation13], 2048
        $region112: #{tpu_custom_call.1} parent=87 // pred_fallthru
          _
        // Predicated region
        $region113: #{tpu_custom_call.1} parent=87 // pred_check
          %p682 = pneg %p355
        $region114: #{tpu_custom_call.1} parent=87 // pred_check_branch
          %684 = sbr.rel (%p682) target = $region116
        $region115: #{tpu_custom_call.1} parent=87 // pred_region
          %685 = dma.done [#allocation13], 2048
        $region116: #{tpu_custom_call.1} parent=87 // pred_fallthru
          _
        // Predicated region
        $region117: #{tpu_custom_call.1} parent=87 // pred_check
          %p686 = pneg %p397
        $region118: #{tpu_custom_call.1} parent=87 // pred_check_branch
          %688 = sbr.rel (%p686) target = $region120
        $region119: #{tpu_custom_call.1} parent=87 // pred_region
          %689 = dma.done [#allocation16], 2048
        $region120: #{tpu_custom_call.1} parent=87 // pred_fallthru
          _
        %p690 = pneg %p57
        %p691 = pneg %p54
        %p692 = pneg %p78
        %p693 = pneg %p75
        %p694 = pneg %p99
        %p695 = pneg %p96
        %p696 = scmp.lt.s32.totalorder %s41, 2
        %s697 = scalar_select %p696, %s41, 2
        %s698 = smul.addr %s697, 4
        %s699 = scalar_lea.vmem %s3, %s698
        %p700 = pneg %p125
        %p701 = pneg %p122
        %s702 = sand.u32 %s41, 1
        %s703 = scalar_lea.sflag [#allocation7], %s702
        %s704 = sand.u32 %s138, 1
        %s705 = smul.addr %s704, 64
        %s706 = scalar_lea.vmem [#allocation6], %s705
        %p707 = pneg %p151
        %p708 = pneg %p148
        %s709 = sand.u32 %s41, 1
        %s710 = scalar_lea.sflag [#allocation7], %s709
        %s711 = sand.u32 %s164, 1
        %s712 = scalar_lea.vmem [#allocation8], %s711
        %p713 = pneg %p177
        %p714 = pneg %p174
        %s715 = sand.u32 %s41, 1
        %s716 = scalar_lea.sflag [#allocation10], %s715
        %s717 = sand.u32 %s190, 1
        %s718 = smul.addr %s717, 64
        %s719 = scalar_lea.vmem [#allocation9], %s718
        %p720 = pneg %p203
        %p721 = pneg %p200
        %p722 = scmp.lt.s32.totalorder %s41, 2
        %s723 = scalar_select %p722, %s41, 2
        %s724 = scalar_lea.vmem %s7, %s723
        %p725 = pneg %p229
        %p726 = pneg %p226
        %p727 = pneg %p250
        %p728 = pneg %p247
        %p729 = pneg %p271
        %p730 = pneg %p268
        %p731 = pneg %p292
        %p732 = pneg %p289
        %p733 = pneg %p313
        %p734 = pneg %p310
        %p735 = pneg %p334
        %p736 = pneg %p331
        %p737 = pneg %p355
        %p738 = pneg %p352
        %p739 = pneg %p376
        %p740 = pneg %p373
        %p741 = pneg %p397
        %p742 = pneg %p394
        %p743 = pneg %p418
        %p744 = pneg %p415
        %p745 = pneg %p439
        %p746 = pneg %p436
        %p747 = pneg %p460
        %p748 = pneg %p457
        %p749 = scmp.lt.s32.totalorder %s41, 2
        %s750 = scalar_select %p749, %s41, 2
        %s751 = smul.addr %s750, 4
        %s752 = scalar_lea.vmem %s3, %s751
        %p753 = scmp.lt.s32.totalorder %s41, 2
        %s754 = scalar_select %p753, %s41, 2
        %s755 = scalar_lea.vmem %s7, %s754
        %p757 = scmp.eq.s32.totalorder %s41, 0
        // Predicated region
        $region121: #{tpu_custom_call.1} parent=87 // pred_check
          %p758 = pneg %p757
        $region122: #{tpu_custom_call.1} parent=87 // pred_check_branch
          %760 = sbr.rel (%p758) target = $region124
        $region123: #{tpu_custom_call.1} parent=87 // pred_region
          %v761 = vld [vmem:[#allocation3] sm:$0xf]
          %v762 = vld [vmem:[#allocation3 + $0x4] sm:$0xf]
          %v763 = vld [vmem:[#allocation3 + $0x8] sm:$0xf]
          %v764 = vld [vmem:[#allocation3 + $0xc] sm:$0xf]
          %v765 = vld [vmem:[#allocation3 + $0x10] sm:$0xf]
          %v766 = vld [vmem:[#allocation3 + $0x14] sm:$0xf]
          %v767 = vld [vmem:[#allocation3 + $0x18] sm:$0xf]
          %v768 = vld [vmem:[#allocation3 + $0x1c] sm:$0xf]
          %v769 = vld [vmem:[#allocation3 + $0x20] sm:$0xf]
          %v770 = vld [vmem:[#allocation3 + $0x24] sm:$0xf]
          %v771 = vld [vmem:[#allocation3 + $0x28] sm:$0xf]
          %v772 = vld [vmem:[#allocation3 + $0x2c] sm:$0xf]
          %v773 = vld [vmem:[#allocation3 + $0x30] sm:$0xf]
          %v774 = vld [vmem:[#allocation3 + $0x34] sm:$0xf]
          %v775 = vld [vmem:[#allocation3 + $0x38] sm:$0xf]
          %v776 = vld [vmem:[#allocation3 + $0x3c] sm:$0xf]
          %v793 = vunpack.c.l.b16 %v761
          %v794 = vunpack.c.l.b16 %v762
          %v795 = vunpack.c.l.b16 %v763
          %v796 = vunpack.c.l.b16 %v764
          %v797 = vunpack.c.l.b16 %v765
          %v798 = vunpack.c.l.b16 %v766
          %v799 = vunpack.c.l.b16 %v767
          %v800 = vunpack.c.l.b16 %v768
          %v801 = vunpack.c.l.b16 %v769
          %v802 = vunpack.c.l.b16 %v770
          %v803 = vunpack.c.l.b16 %v771
          %v804 = vunpack.c.l.b16 %v772
          %v805 = vunpack.c.l.b16 %v773
          %v806 = vunpack.c.l.b16 %v774
          %v807 = vunpack.c.l.b16 %v775
          %v808 = vunpack.c.l.b16 %v776
          %v809 = vpack.c.b16 %v794, %v793
          %v810 = vpack.c.b16 %v796, %v795
          %v811 = vpack.c.b16 %v798, %v797
          %v812 = vpack.c.b16 %v800, %v799
          %v813 = vpack.c.b16 %v802, %v801
          %v814 = vpack.c.b16 %v804, %v803
          %v815 = vpack.c.b16 %v806, %v805
          %v816 = vpack.c.b16 %v808, %v807
          %825 = vst [vmem:[#allocation2] sm:$0xff] %v809
          %826 = vst [vmem:[#allocation2 + $0x8] sm:$0xff] %v810
          %827 = vst [vmem:[#allocation2 + $0x10] sm:$0xff] %v811
          %828 = vst [vmem:[#allocation2 + $0x18] sm:$0xff] %v812
          %829 = vst [vmem:[#allocation2 + $0x20] sm:$0xff] %v813
          %830 = vst [vmem:[#allocation2 + $0x28] sm:$0xff] %v814
          %831 = vst [vmem:[#allocation2 + $0x30] sm:$0xff] %v815
          %832 = vst [vmem:[#allocation2 + $0x38] sm:$0xff] %v816
        $region124: #{tpu_custom_call.1} parent=87 // pred_fallthru
          _
        %v833 = vld [vmem:[#allocation2] sm:$0xff]
        %v834 = vld [vmem:[#allocation2 + $0x8] sm:$0xff]
        %v835 = vld [vmem:[#allocation2 + $0x10] sm:$0xff]
        %v836 = vld [vmem:[#allocation2 + $0x18] sm:$0xff]
        %v837 = vld [vmem:[#allocation2 + $0x20] sm:$0xff]
        %v838 = vld [vmem:[#allocation2 + $0x28] sm:$0xff]
        %v839 = vld [vmem:[#allocation2 + $0x30] sm:$0xff]
        %v840 = vld [vmem:[#allocation2 + $0x38] sm:$0xff]
        %v841 = vld [vmem:[%s0] sm:$0xf]
        %v842 = vld [vmem:[%s0 + $0x4] sm:$0xf]
        %v843 = vld [vmem:[%s0 + $0x8] sm:$0xf]
        %v844 = vld [vmem:[%s0 + $0xc] sm:$0xf]
        %v845 = vld [vmem:[%s0 + $0x10] sm:$0xf]
        %v846 = vld [vmem:[%s0 + $0x14] sm:$0xf]
        %v847 = vld [vmem:[%s0 + $0x18] sm:$0xf]
        %v848 = vld [vmem:[%s0 + $0x1c] sm:$0xf]
        %v849 = vld [vmem:[%s0 + $0x20] sm:$0xf]
        %v850 = vld [vmem:[%s0 + $0x24] sm:$0xf]
        %v851 = vld [vmem:[%s0 + $0x28] sm:$0xf]
        %v852 = vld [vmem:[%s0 + $0x2c] sm:$0xf]
        %v853 = vld [vmem:[%s0 + $0x30] sm:$0xf]
        %v854 = vld [vmem:[%s0 + $0x34] sm:$0xf]
        %v855 = vld [vmem:[%s0 + $0x38] sm:$0xf]
        %v856 = vld [vmem:[%s0 + $0x3c] sm:$0xf]
        %v857 = vld [vmem:[%s2] sm:$0xf]
        %v858 = vld [vmem:[%s2 + $0x4] sm:$0xf]
        %v859 = vld [vmem:[%s2 + $0x8] sm:$0xf]
        %v860 = vld [vmem:[%s2 + $0xc] sm:$0xf]
        %v861 = vld [vmem:[%s2 + $0x10] sm:$0xf]
        %v862 = vld [vmem:[%s2 + $0x14] sm:$0xf]
        %v863 = vld [vmem:[%s2 + $0x18] sm:$0xf]
        %v864 = vld [vmem:[%s2 + $0x1c] sm:$0xf]
        %v865 = vld [vmem:[%s2 + $0x20] sm:$0xf]
        %v866 = vld [vmem:[%s2 + $0x24] sm:$0xf]
        %v867 = vld [vmem:[%s2 + $0x28] sm:$0xf]
        %v868 = vld [vmem:[%s2 + $0x2c] sm:$0xf]
        %v869 = vld [vmem:[%s2 + $0x30] sm:$0xf]
        %v870 = vld [vmem:[%s2 + $0x34] sm:$0xf]
        %v871 = vld [vmem:[%s2 + $0x38] sm:$0xf]
        %v872 = vld [vmem:[%s2 + $0x3c] sm:$0xf]
        %v873 = vld [vmem:[%s752] sm:$0xf]
        %v890 = vunpack.c.l.b16 %v857
        %v891 = vunpack.c.l.b16 %v858
        %v892 = vunpack.c.l.b16 %v859
        %v893 = vunpack.c.l.b16 %v860
        %v894 = vunpack.c.l.b16 %v861
        %v895 = vunpack.c.l.b16 %v862
        %v896 = vunpack.c.l.b16 %v863
        %v897 = vunpack.c.l.b16 %v864
        %v898 = vunpack.c.l.b16 %v865
        %v899 = vunpack.c.l.b16 %v866
        %v900 = vunpack.c.l.b16 %v867
        %v901 = vunpack.c.l.b16 %v868
        %v902 = vunpack.c.l.b16 %v869
        %v903 = vunpack.c.l.b16 %v870
        %v904 = vunpack.c.l.b16 %v871
        %v905 = vunpack.c.l.b16 %v872
        %v906 = vpack.c.b16 %v891, %v890
        %v907 = vpack.c.b16 %v893, %v892
        %v908 = vpack.c.b16 %v895, %v894
        %v909 = vpack.c.b16 %v897, %v896
        %v910 = vpack.c.b16 %v899, %v898
        %v911 = vpack.c.b16 %v901, %v900
        %v912 = vpack.c.b16 %v903, %v902
        %v913 = vpack.c.b16 %v905, %v904
        %vm914 = vcmask 64512
        %v916 = vsel %vm914, %v906, 0
        %v919 = vsel %vm914, %v907, 0
        %v922 = vsel %vm914, %v908, 0
        %v925 = vsel %vm914, %v909, 0
        %v928 = vsel %vm914, %v910, 0
        %v931 = vsel %vm914, %v911, 0
        %v934 = vsel %vm914, %v912, 0
        %v937 = vsel %vm914, %v913, 0
        %vm939 = vcmask 1043456
        %v941 = vsel %vm939, %v873, 0
        %943 = vmatprep.subr.bf16.mxu0 0
        %944 = vmatpush1.bf16.msra.mxu0 %v941
        %945 = vmatprep.subr.bf16.mxu0 0
        %946 = vmatpush1.bf16.msra.mxu0 0
        %947 = vmatprep.subr.bf16.mxu0 0
        %948 = vmatpush1.bf16.msra.mxu0 0
        %949 = vmatprep.subr.bf16.mxu0 0
        %950 = vmatpush1.bf16.msra.mxu0 0
        %951 = vmatprep.subr.bf16.mxu0 0
        %952 = vmatpush1.bf16.msra.mxu0 0
        %953 = vmatprep.subr.bf16.mxu0 0
        %954 = vmatpush1.bf16.msra.mxu0 0
        %955 = vmatprep.subr.bf16.mxu0 0
        %956 = vmatpush1.bf16.msra.mxu0 0
        %957 = vmatprep.subr.bf16.mxu0 0
        %958 = vmatpush1.bf16.msra.mxu0 0
        %959 = vmatprep.subr.bf16.mxu0 0
        %960 = vmatpush1.bf16.msra.mxu0 0
        %961 = vmatprep.subr.bf16.mxu0 0
        %962 = vmatpush1.bf16.msra.mxu0 0
        %963 = vmatprep.subr.bf16.mxu0 0
        %964 = vmatpush1.bf16.msra.mxu0 0
        %965 = vmatprep.subr.bf16.mxu0 0
        %966 = vmatpush1.bf16.msra.mxu0 0
        %967 = vmatprep.subr.bf16.mxu0 0
        %968 = vmatpush1.bf16.msra.mxu0 0
        %969 = vmatprep.subr.bf16.mxu0 0
        %970 = vmatpush1.bf16.msra.mxu0 0
        %971 = vmatprep.subr.bf16.mxu0 0
        %972 = vmatpush1.bf16.msra.mxu0 0
        %973 = vmatprep.subr.bf16.mxu0 0
        %974 = vmatpush1.bf16.msra.mxu0 0
        %975 = vmatprep.mubr.bf16.mxu0 0
        %976 = vmatmul.mubr.bf16.gmra.mrb[0].mxu0 %v916
        %v977 = vpop.f32.mrb[0].mxu0
        %v978 = vadd.f32 0.0, %v977
        %v979 = vpop.f32.mrb[0].mxu0
        %v980 = vpop.f32.mrb[0].mxu0
        %v981 = vadd.f32 0.0, %v980
        %v982 = vpop.f32.mrb[0].mxu0
        %983 = vmatprep.mubr.bf16.mxu0 0
        %984 = vmatmul.mubr.bf16.gmra.mrb[0].mxu0 %v919
        %v985 = vpop.f32.mrb[0].mxu0
        %v986 = vadd.f32 0.0, %v985
        %v987 = vpop.f32.mrb[0].mxu0
        %v988 = vpop.f32.mrb[0].mxu0
        %v989 = vadd.f32 0.0, %v988
        %v990 = vpop.f32.mrb[0].mxu0
        %991 = vmatprep.mubr.bf16.mxu0 0
        %992 = vmatmul.mubr.bf16.gmra.mrb[0].mxu0 %v922
        %v993 = vpop.f32.mrb[0].mxu0
        %v994 = vadd.f32 0.0, %v993
        %v995 = vpop.f32.mrb[0].mxu0
        %v996 = vpop.f32.mrb[0].mxu0
        %v997 = vadd.f32 0.0, %v996
        %v998 = vpop.f32.mrb[0].mxu0
        %999 = vmatprep.mubr.bf16.mxu0 0
        %1000 = vmatmul.mubr.bf16.gmra.mrb[0].mxu0 %v925
        %v1001 = vpop.f32.mrb[0].mxu0
        %v1002 = vadd.f32 0.0, %v1001
        %v1003 = vpop.f32.mrb[0].mxu0
        %v1004 = vpop.f32.mrb[0].mxu0
        %v1005 = vadd.f32 0.0, %v1004
        %v1006 = vpop.f32.mrb[0].mxu0
        %1007 = vmatprep.mubr.bf16.mxu0 0
        %1008 = vmatmul.mubr.bf16.gmra.mrb[0].mxu0 %v928
        %v1009 = vpop.f32.mrb[0].mxu0
        %v1010 = vadd.f32 0.0, %v1009
        %v1011 = vpop.f32.mrb[0].mxu0
        %v1012 = vpop.f32.mrb[0].mxu0
        %v1013 = vadd.f32 0.0, %v1012
        %v1014 = vpop.f32.mrb[0].mxu0
        %1015 = vmatprep.mubr.bf16.mxu0 0
        %1016 = vmatmul.mubr.bf16.gmra.mrb[0].mxu0 %v931
        %v1017 = vpop.f32.mrb[0].mxu0
        %v1018 = vadd.f32 0.0, %v1017
        %v1019 = vpop.f32.mrb[0].mxu0
        %v1020 = vpop.f32.mrb[0].mxu0
        %v1021 = vadd.f32 0.0, %v1020
        %v1022 = vpop.f32.mrb[0].mxu0
        %1023 = vmatprep.mubr.bf16.mxu0 0
        %1024 = vmatmul.mubr.bf16.gmra.mrb[0].mxu0 %v934
        %v1025 = vpop.f32.mrb[0].mxu0
        %v1026 = vadd.f32 0.0, %v1025
        %v1027 = vpop.f32.mrb[0].mxu0
        %v1028 = vpop.f32.mrb[0].mxu0
        %v1029 = vadd.f32 0.0, %v1028
        %v1030 = vpop.f32.mrb[0].mxu0
        %1031 = vmatprep.mubr.bf16.mxu0 0
        %1032 = vmatmul.mubr.bf16.gmra.mrb[0].mxu0 %v937
        %v1033 = vpop.f32.mrb[0].mxu0
        %v1034 = vadd.f32 0.0, %v1033
        %v1035 = vpop.f32.mrb[0].mxu0
        %v1036 = vpop.f32.mrb[0].mxu0
        %v1037 = vadd.f32 0.0, %v1036
        %v1038 = vpop.f32.mrb[0].mxu0
        %1039 = vdwg.mxu0
        %v1056 = vunpack.c.l.b16 %v841
        %v1057 = vunpack.c.l.b16 %v842
        %v1058 = vunpack.c.l.b16 %v843
        %v1059 = vunpack.c.l.b16 %v844
        %v1060 = vunpack.c.l.b16 %v845
        %v1061 = vunpack.c.l.b16 %v846
        %v1062 = vunpack.c.l.b16 %v847
        %v1063 = vunpack.c.l.b16 %v848
        %v1064 = vunpack.c.l.b16 %v849
        %v1065 = vunpack.c.l.b16 %v850
        %v1066 = vunpack.c.l.b16 %v851
        %v1067 = vunpack.c.l.b16 %v852
        %v1068 = vunpack.c.l.b16 %v853
        %v1069 = vunpack.c.l.b16 %v854
        %v1070 = vunpack.c.l.b16 %v855
        %v1071 = vunpack.c.l.b16 %v856
        %v1072 = vpack.c.b16 %v1057, %v1056
        %v1073 = vpack.c.b16 %v1059, %v1058
        %v1074 = vpack.c.b16 %v1061, %v1060
        %v1075 = vpack.c.b16 %v1063, %v1062
        %v1076 = vpack.c.b16 %v1065, %v1064
        %v1077 = vpack.c.b16 %v1067, %v1066
        %v1078 = vpack.c.b16 %v1069, %v1068
        %v1079 = vpack.c.b16 %v1071, %v1070
        %1088 = vmatprep.subr.bf16.mxu0 0
        %1089 = vmatpush1.bf16.msra.mxu0 %v833
        %1090 = vmatprep.subr.bf16.mxu0 0
        %1091 = vmatpush1.bf16.msra.mxu0 %v834
        %1092 = vmatprep.subr.bf16.mxu0 0
        %1093 = vmatpush1.bf16.msra.mxu0 %v835
        %1094 = vmatprep.subr.bf16.mxu0 0
        %1095 = vmatpush1.bf16.msra.mxu0 %v836
        %1096 = vmatprep.subr.bf16.mxu0 0
        %1097 = vmatpush1.bf16.msra.mxu0 %v837
        %1098 = vmatprep.subr.bf16.mxu0 0
        %1099 = vmatpush1.bf16.msra.mxu0 %v838
        %1100 = vmatprep.subr.bf16.mxu0 0
        %1101 = vmatpush1.bf16.msra.mxu0 %v839
        %1102 = vmatprep.subr.bf16.mxu0 0
        %1103 = vmatpush1.bf16.msra.mxu0 %v840
        %1104 = vmatprep.subr.bf16.mxu0 0
        %1105 = vmatpush1.bf16.msra.mxu0 0
        %1106 = vmatprep.subr.bf16.mxu0 0
        %1107 = vmatpush1.bf16.msra.mxu0 0
        %1108 = vmatprep.subr.bf16.mxu0 0
        %1109 = vmatpush1.bf16.msra.mxu0 0
        %1110 = vmatprep.subr.bf16.mxu0 0
        %1111 = vmatpush1.bf16.msra.mxu0 0
        %1112 = vmatprep.subr.bf16.mxu0 0
        %1113 = vmatpush1.bf16.msra.mxu0 0
        %1114 = vmatprep.subr.bf16.mxu0 0
        %1115 = vmatpush1.bf16.msra.mxu0 0
        %1116 = vmatprep.subr.bf16.mxu0 0
        %1117 = vmatpush1.bf16.msra.mxu0 0
        %1118 = vmatprep.subr.bf16.mxu0 0
        %1119 = vmatpush1.bf16.msra.mxu0 0
        %1120 = vmatprep.mubr.bf16.mxu0 0
        %1121 = vmatmul.mubr.bf16.gmra.mrb[0].mxu0 %v1072
        %v1122 = vpop.f32.mrb[0].mxu0
        %v1123 = vadd.f32 %v978, %v1122
        %v1124 = vpop.f32.mrb[0].mxu0
        %v1125 = vpop.f32.mrb[0].mxu0
        %v1126 = vadd.f32 %v981, %v1125
        %v1127 = vpop.f32.mrb[0].mxu0
        %1128 = vmatprep.mubr.bf16.mxu0 0
        %1129 = vmatmul.mubr.bf16.gmra.mrb[0].mxu0 %v1073
        %v1130 = vpop.f32.mrb[0].mxu0
        %v1131 = vadd.f32 %v986, %v1130
        %v1132 = vpop.f32.mrb[0].mxu0
        %v1133 = vpop.f32.mrb[0].mxu0
        %v1134 = vadd.f32 %v989, %v1133
        %v1135 = vpop.f32.mrb[0].mxu0
        %1136 = vmatprep.mubr.bf16.mxu0 0
        %1137 = vmatmul.mubr.bf16.gmra.mrb[0].mxu0 %v1074
        %v1138 = vpop.f32.mrb[0].mxu0
        %v1139 = vadd.f32 %v994, %v1138
        %v1140 = vpop.f32.mrb[0].mxu0
        %v1141 = vpop.f32.mrb[0].mxu0
        %v1142 = vadd.f32 %v997, %v1141
        %v1143 = vpop.f32.mrb[0].mxu0
        %1144 = vmatprep.mubr.bf16.mxu0 0
        %1145 = vmatmul.mubr.bf16.gmra.mrb[0].mxu0 %v1075
        %v1146 = vpop.f32.mrb[0].mxu0
        %v1147 = vadd.f32 %v1002, %v1146
        %v1148 = vpop.f32.mrb[0].mxu0
        %v1149 = vpop.f32.mrb[0].mxu0
        %v1150 = vadd.f32 %v1005, %v1149
        %v1151 = vpop.f32.mrb[0].mxu0
        %1152 = vmatprep.mubr.bf16.mxu0 0
        %1153 = vmatmul.mubr.bf16.gmra.mrb[0].mxu0 %v1076
        %v1154 = vpop.f32.mrb[0].mxu0
        %v1155 = vadd.f32 %v1010, %v1154
        %v1156 = vpop.f32.mrb[0].mxu0
        %v1157 = vpop.f32.mrb[0].mxu0
        %v1158 = vadd.f32 %v1013, %v1157
        %v1159 = vpop.f32.mrb[0].mxu0
        %1160 = vmatprep.mubr.bf16.mxu0 0
        %1161 = vmatmul.mubr.bf16.gmra.mrb[0].mxu0 %v1077
        %v1162 = vpop.f32.mrb[0].mxu0
        %v1163 = vadd.f32 %v1018, %v1162
        %v1164 = vpop.f32.mrb[0].mxu0
        %v1165 = vpop.f32.mrb[0].mxu0
        %v1166 = vadd.f32 %v1021, %v1165
        %v1167 = vpop.f32.mrb[0].mxu0
        %1168 = vmatprep.mubr.bf16.mxu0 0
        %1169 = vmatmul.mubr.bf16.gmra.mrb[0].mxu0 %v1078
        %v1170 = vpop.f32.mrb[0].mxu0
        %v1171 = vadd.f32 %v1026, %v1170
        %v1172 = vpop.f32.mrb[0].mxu0
        %v1173 = vpop.f32.mrb[0].mxu0
        %v1174 = vadd.f32 %v1029, %v1173
        %v1175 = vpop.f32.mrb[0].mxu0
        %1176 = vmatprep.mubr.bf16.mxu0 0
        %1177 = vmatmul.mubr.bf16.gmra.mrb[0].mxu0 %v1079
        %v1178 = vpop.f32.mrb[0].mxu0
        %v1179 = vadd.f32 %v1034, %v1178
        %v1180 = vpop.f32.mrb[0].mxu0
        %v1181 = vpop.f32.mrb[0].mxu0
        %v1182 = vadd.f32 %v1037, %v1181
        %v1183 = vpop.f32.mrb[0].mxu0
        %1184 = vdwg.mxu0
        %v1185 = vpack.c.bf16 %v1126, %v1123
        %v1186 = vpack.c.bf16 %v1134, %v1131
        %v1187 = vpack.c.bf16 %v1142, %v1139
        %v1188 = vpack.c.bf16 %v1150, %v1147
        %v1189 = vpack.c.bf16 %v1158, %v1155
        %v1190 = vpack.c.bf16 %v1166, %v1163
        %v1191 = vpack.c.bf16 %v1174, %v1171
        %v1192 = vpack.c.bf16 %v1182, %v1179
        %v1193 = vld [vmem:[%s652] sm:$0xf]
        %v1194 = vld [vmem:[%s652 + $0x4] sm:$0xf]
        %v1195 = vld [vmem:[%s652 + $0x8] sm:$0xf]
        %v1196 = vld [vmem:[%s652 + $0xc] sm:$0xf]
        %v1197 = vld [vmem:[%s652 + $0x10] sm:$0xf]
        %v1198 = vld [vmem:[%s652 + $0x14] sm:$0xf]
        %v1199 = vld [vmem:[%s652 + $0x18] sm:$0xf]
        %v1200 = vld [vmem:[%s652 + $0x1c] sm:$0xf]
        %v1201 = vld [vmem:[%s652 + $0x20] sm:$0xf]
        %v1202 = vld [vmem:[%s652 + $0x24] sm:$0xf]
        %v1203 = vld [vmem:[%s652 + $0x28] sm:$0xf]
        %v1204 = vld [vmem:[%s652 + $0x2c] sm:$0xf]
        %v1205 = vld [vmem:[%s652 + $0x30] sm:$0xf]
        %v1206 = vld [vmem:[%s652 + $0x34] sm:$0xf]
        %v1207 = vld [vmem:[%s652 + $0x38] sm:$0xf]
        %v1208 = vld [vmem:[%s652 + $0x3c] sm:$0xf]
        %v1209 = vld [vmem:[%s660] sm:$0x1]
        %v1211 = vlaneseq
        %v1212 = vshrl.u32 %v1211, 7
        %v1213 = vsub.s32 0, %v1212
        %v1214 = vrot.slane %v1209, %v1213
        %v1232 = vunpack.c.l.b16 %v1193
        %v1233 = vunpack.c.l.b16 %v1194
        %v1234 = vunpack.c.l.b16 %v1195
        %v1235 = vunpack.c.l.b16 %v1196
        %v1236 = vunpack.c.l.b16 %v1197
        %v1237 = vunpack.c.l.b16 %v1198
        %v1238 = vunpack.c.l.b16 %v1199
        %v1239 = vunpack.c.l.b16 %v1200
        %v1240 = vunpack.c.l.b16 %v1201
        %v1241 = vunpack.c.l.b16 %v1202
        %v1242 = vunpack.c.l.b16 %v1203
        %v1243 = vunpack.c.l.b16 %v1204
        %v1244 = vunpack.c.l.b16 %v1205
        %v1245 = vunpack.c.l.b16 %v1206
        %v1246 = vunpack.c.l.b16 %v1207
        %v1247 = vunpack.c.l.b16 %v1208
        %v1248 = vpack.c.b16 %v1233, %v1232
        %v1249 = vpack.c.b16 %v1235, %v1234
        %v1250 = vpack.c.b16 %v1237, %v1236
        %v1251 = vpack.c.b16 %v1239, %v1238
        %v1252 = vpack.c.b16 %v1241, %v1240
        %v1253 = vpack.c.b16 %v1243, %v1242
        %v1254 = vpack.c.b16 %v1245, %v1244
        %v1255 = vpack.c.b16 %v1247, %v1246
        %1264 = vmatprep.subr.bf16.mxu0 0
        %1265 = vmatpush1.bf16.msra.mxu0 %v1248
        %1266 = vmatprep.subr.bf16.mxu0 0
        %1267 = vmatpush1.bf16.msra.mxu0 %v1249
        %1268 = vmatprep.subr.bf16.mxu0 0
        %1269 = vmatpush1.bf16.msra.mxu0 %v1250
        %1270 = vmatprep.subr.bf16.mxu0 0
        %1271 = vmatpush1.bf16.msra.mxu0 %v1251
        %1272 = vmatprep.subr.bf16.mxu0 0
        %1273 = vmatpush1.bf16.msra.mxu0 %v1252
        %1274 = vmatprep.subr.bf16.mxu0 0
        %1275 = vmatpush1.bf16.msra.mxu0 %v1253
        %1276 = vmatprep.subr.bf16.mxu0 0
        %1277 = vmatpush1.bf16.msra.mxu0 %v1254
        %1278 = vmatprep.subr.bf16.mxu0 0
        %1279 = vmatpush1.bf16.msra.mxu0 %v1255
        %1280 = vmatprep.subr.bf16.mxu0 0
        %1281 = vmatpush1.bf16.msra.mxu0 0
        %1282 = vmatprep.subr.bf16.mxu0 0
        %1283 = vmatpush1.bf16.msra.mxu0 0
        %1284 = vmatprep.subr.bf16.mxu0 0
        %1285 = vmatpush1.bf16.msra.mxu0 0
        %1286 = vmatprep.subr.bf16.mxu0 0
        %1287 = vmatpush1.bf16.msra.mxu0 0
        %1288 = vmatprep.subr.bf16.mxu0 0
        %1289 = vmatpush1.bf16.msra.mxu0 0
        %1290 = vmatprep.subr.bf16.mxu0 0
        %1291 = vmatpush1.bf16.msra.mxu0 0
        %1292 = vmatprep.subr.bf16.mxu0 0
        %1293 = vmatpush1.bf16.msra.mxu0 0
        %1294 = vmatprep.subr.bf16.mxu0 0
        %1295 = vmatpush1.bf16.msra.mxu0 0
        %1296 = vmatprep.mubr.bf16.mxu0 0
        %1297 = vmatmul.mubr.bf16.gmra.mrb[0].mxu0 %v1185
        %v1298 = vpop.f32.mrb[0].mxu0
        %v1299 = vadd.f32 %v1214, %v1298
        %v1300 = vpop.f32.mrb[0].mxu0
        %v1301 = vpop.f32.mrb[0].mxu0
        %v1302 = vadd.f32 %v1214, %v1301
        %v1303 = vpop.f32.mrb[0].mxu0
        %1304 = vmatprep.mubr.bf16.mxu0 0
        %1305 = vmatmul.mubr.bf16.gmra.mrb[0].mxu0 %v1186
        %v1306 = vpop.f32.mrb[0].mxu0
        %v1307 = vadd.f32 %v1214, %v1306
        %v1308 = vpop.f32.mrb[0].mxu0
        %v1309 = vpop.f32.mrb[0].mxu0
        %v1310 = vadd.f32 %v1214, %v1309
        %v1311 = vpop.f32.mrb[0].mxu0
        %1312 = vmatprep.mubr.bf16.mxu0 0
        %1313 = vmatmul.mubr.bf16.gmra.mrb[0].mxu0 %v1187
        %v1314 = vpop.f32.mrb[0].mxu0
        %v1315 = vadd.f32 %v1214, %v1314
        %v1316 = vpop.f32.mrb[0].mxu0
        %v1317 = vpop.f32.mrb[0].mxu0
        %v1318 = vadd.f32 %v1214, %v1317
        %v1319 = vpop.f32.mrb[0].mxu0
        %1320 = vmatprep.mubr.bf16.mxu0 0
        %1321 = vmatmul.mubr.bf16.gmra.mrb[0].mxu0 %v1188
        %v1322 = vpop.f32.mrb[0].mxu0
        %v1323 = vadd.f32 %v1214, %v1322
        %v1324 = vpop.f32.mrb[0].mxu0
        %v1325 = vpop.f32.mrb[0].mxu0
        %v1326 = vadd.f32 %v1214, %v1325
        %v1327 = vpop.f32.mrb[0].mxu0
        %1328 = vmatprep.mubr.bf16.mxu0 0
        %1329 = vmatmul.mubr.bf16.gmra.mrb[0].mxu0 %v1189
        %v1330 = vpop.f32.mrb[0].mxu0
        %v1331 = vadd.f32 %v1214, %v1330
        %v1332 = vpop.f32.mrb[0].mxu0
        %v1333 = vpop.f32.mrb[0].mxu0
        %v1334 = vadd.f32 %v1214, %v1333
        %v1335 = vpop.f32.mrb[0].mxu0
        %1336 = vmatprep.mubr.bf16.mxu0 0
        %1337 = vmatmul.mubr.bf16.gmra.mrb[0].mxu0 %v1190
        %v1338 = vpop.f32.mrb[0].mxu0
        %v1339 = vadd.f32 %v1214, %v1338
        %v1340 = vpop.f32.mrb[0].mxu0
        %v1341 = vpop.f32.mrb[0].mxu0
        %v1342 = vadd.f32 %v1214, %v1341
        %v1343 = vpop.f32.mrb[0].mxu0
        %1344 = vmatprep.mubr.bf16.mxu0 0
        %1345 = vmatmul.mubr.bf16.gmra.mrb[0].mxu0 %v1191
        %v1346 = vpop.f32.mrb[0].mxu0
        %v1347 = vadd.f32 %v1214, %v1346
        %v1348 = vpop.f32.mrb[0].mxu0
        %v1349 = vpop.f32.mrb[0].mxu0
        %v1350 = vadd.f32 %v1214, %v1349
        %v1351 = vpop.f32.mrb[0].mxu0
        %1352 = vmatprep.mubr.bf16.mxu0 0
        %1353 = vmatmul.mubr.bf16.gmra.mrb[0].mxu0 %v1192
        %v1354 = vpop.f32.mrb[0].mxu0
        %v1355 = vadd.f32 %v1214, %v1354
        %v1356 = vpop.f32.mrb[0].mxu0
        %v1357 = vpop.f32.mrb[0].mxu0
        %v1358 = vadd.f32 %v1214, %v1357
        %v1359 = vpop.f32.mrb[0].mxu0
        %1360 = vdwg.mxu0
        %v1361 = vmax.f32 %v1299, 0.0
        %v1362 = vmax.f32 %v1302, 0.0
        %v1363 = vmax.f32 %v1307, 0.0
        %v1364 = vmax.f32 %v1310, 0.0
        %v1365 = vmax.f32 %v1315, 0.0
        %v1366 = vmax.f32 %v1318, 0.0
        %v1367 = vmax.f32 %v1323, 0.0
        %v1368 = vmax.f32 %v1326, 0.0
        %v1369 = vmax.f32 %v1331, 0.0
        %v1370 = vmax.f32 %v1334, 0.0
        %v1371 = vmax.f32 %v1339, 0.0
        %v1372 = vmax.f32 %v1342, 0.0
        %v1373 = vmax.f32 %v1347, 0.0
        %v1374 = vmax.f32 %v1350, 0.0
        %v1375 = vmax.f32 %v1355, 0.0
        %v1376 = vmax.f32 %v1358, 0.0
        %v1377 = vpack.c.bf16 %v1362, %v1361
        %v1378 = vpack.c.bf16 %v1364, %v1363
        %v1379 = vpack.c.bf16 %v1366, %v1365
        %v1380 = vpack.c.bf16 %v1368, %v1367
        %v1381 = vpack.c.bf16 %v1370, %v1369
        %v1382 = vpack.c.bf16 %v1372, %v1371
        %v1383 = vpack.c.bf16 %v1374, %v1373
        %v1384 = vpack.c.bf16 %v1376, %v1375
        %v1385 = vld [vmem:[%s669] sm:$0xf]
        %v1386 = vld [vmem:[%s669 + $0x4] sm:$0xf]
        %v1387 = vld [vmem:[%s669 + $0x8] sm:$0xf]
        %v1388 = vld [vmem:[%s669 + $0xc] sm:$0xf]
        %v1389 = vld [vmem:[%s669 + $0x10] sm:$0xf]
        %v1390 = vld [vmem:[%s669 + $0x14] sm:$0xf]
        %v1391 = vld [vmem:[%s669 + $0x18] sm:$0xf]
        %v1392 = vld [vmem:[%s669 + $0x1c] sm:$0xf]
        %v1393 = vld [vmem:[%s669 + $0x20] sm:$0xf]
        %v1394 = vld [vmem:[%s669 + $0x24] sm:$0xf]
        %v1395 = vld [vmem:[%s669 + $0x28] sm:$0xf]
        %v1396 = vld [vmem:[%s669 + $0x2c] sm:$0xf]
        %v1397 = vld [vmem:[%s669 + $0x30] sm:$0xf]
        %v1398 = vld [vmem:[%s669 + $0x34] sm:$0xf]
        %v1399 = vld [vmem:[%s669 + $0x38] sm:$0xf]
        %v1400 = vld [vmem:[%s669 + $0x3c] sm:$0xf]
        %v1401 = vld [vmem:[%s755] sm:$0x1]
        %v1403 = vlaneseq
        %v1404 = vshrl.u32 %v1403, 7
        %v1405 = vsub.s32 0, %v1404
        %v1406 = vrot.slane %v1401, %v1405
        %v1424 = vunpack.c.l.b16 %v1385
        %v1425 = vunpack.c.l.b16 %v1386
        %v1426 = vunpack.c.l.b16 %v1387
        %v1427 = vunpack.c.l.b16 %v1388
        %v1428 = vunpack.c.l.b16 %v1389
        %v1429 = vunpack.c.l.b16 %v1390
        %v1430 = vunpack.c.l.b16 %v1391
        %v1431 = vunpack.c.l.b16 %v1392
        %v1432 = vunpack.c.l.b16 %v1393
        %v1433 = vunpack.c.l.b16 %v1394
        %v1434 = vunpack.c.l.b16 %v1395
        %v1435 = vunpack.c.l.b16 %v1396
        %v1436 = vunpack.c.l.b16 %v1397
        %v1437 = vunpack.c.l.b16 %v1398
        %v1438 = vunpack.c.l.b16 %v1399
        %v1439 = vunpack.c.l.b16 %v1400
        %v1440 = vpack.c.b16 %v1425, %v1424
        %v1441 = vpack.c.b16 %v1427, %v1426
        %v1442 = vpack.c.b16 %v1429, %v1428
        %v1443 = vpack.c.b16 %v1431, %v1430
        %v1444 = vpack.c.b16 %v1433, %v1432
        %v1445 = vpack.c.b16 %v1435, %v1434
        %v1446 = vpack.c.b16 %v1437, %v1436
        %v1447 = vpack.c.b16 %v1439, %v1438
        %1456 = vmatprep.subr.bf16.mxu0 0
        %1457 = vmatpush1.bf16.msra.mxu0 %v1440
        %1458 = vmatprep.subr.bf16.mxu0 0
        %1459 = vmatpush1.bf16.msra.mxu0 %v1441
        %1460 = vmatprep.subr.bf16.mxu0 0
        %1461 = vmatpush1.bf16.msra.mxu0 %v1442
        %1462 = vmatprep.subr.bf16.mxu0 0
        %1463 = vmatpush1.bf16.msra.mxu0 %v1443
        %1464 = vmatprep.subr.bf16.mxu0 0
        %1465 = vmatpush1.bf16.msra.mxu0 %v1444
        %1466 = vmatprep.subr.bf16.mxu0 0
        %1467 = vmatpush1.bf16.msra.mxu0 %v1445
        %1468 = vmatprep.subr.bf16.mxu0 0
        %1469 = vmatpush1.bf16.msra.mxu0 %v1446
        %1470 = vmatprep.subr.bf16.mxu0 0
        %1471 = vmatpush1.bf16.msra.mxu0 %v1447
        %1472 = vmatprep.subr.bf16.mxu0 0
        %1473 = vmatpush1.bf16.msra.mxu0 0
        %1474 = vmatprep.subr.bf16.mxu0 0
        %1475 = vmatpush1.bf16.msra.mxu0 0
        %1476 = vmatprep.subr.bf16.mxu0 0
        %1477 = vmatpush1.bf16.msra.mxu0 0
        %1478 = vmatprep.subr.bf16.mxu0 0
        %1479 = vmatpush1.bf16.msra.mxu0 0
        %1480 = vmatprep.subr.bf16.mxu0 0
        %1481 = vmatpush1.bf16.msra.mxu0 0
        %1482 = vmatprep.subr.bf16.mxu0 0
        %1483 = vmatpush1.bf16.msra.mxu0 0
        %1484 = vmatprep.subr.bf16.mxu0 0
        %1485 = vmatpush1.bf16.msra.mxu0 0
        %1486 = vmatprep.subr.bf16.mxu0 0
        %1487 = vmatpush1.bf16.msra.mxu0 0
        %1488 = vmatprep.mubr.bf16.mxu0 0
        %1489 = vmatmul.mubr.bf16.gmra.mrb[0].mxu0 %v1377
        %v1490 = vpop.f32.mrb[0].mxu0
        %v1491 = vadd.f32 %v1406, %v1490
        %v1492 = vpop.f32.mrb[0].mxu0
        %v1493 = vpop.f32.mrb[0].mxu0
        %v1494 = vadd.f32 %v1406, %v1493
        %v1495 = vpop.f32.mrb[0].mxu0
        %1496 = vmatprep.mubr.bf16.mxu0 0
        %1497 = vmatmul.mubr.bf16.gmra.mrb[0].mxu0 %v1378
        %v1498 = vpop.f32.mrb[0].mxu0
        %v1499 = vadd.f32 %v1406, %v1498
        %v1500 = vpop.f32.mrb[0].mxu0
        %v1501 = vpop.f32.mrb[0].mxu0
        %v1502 = vadd.f32 %v1406, %v1501
        %v1503 = vpop.f32.mrb[0].mxu0
        %1504 = vmatprep.mubr.bf16.mxu0 0
        %1505 = vmatmul.mubr.bf16.gmra.mrb[0].mxu0 %v1379
        %v1506 = vpop.f32.mrb[0].mxu0
        %v1507 = vadd.f32 %v1406, %v1506
        %v1508 = vpop.f32.mrb[0].mxu0
        %v1509 = vpop.f32.mrb[0].mxu0
        %v1510 = vadd.f32 %v1406, %v1509
        %v1511 = vpop.f32.mrb[0].mxu0
        %1512 = vmatprep.mubr.bf16.mxu0 0
        %1513 = vmatmul.mubr.bf16.gmra.mrb[0].mxu0 %v1380
        %v1514 = vpop.f32.mrb[0].mxu0
        %v1515 = vadd.f32 %v1406, %v1514
        %v1516 = vpop.f32.mrb[0].mxu0
        %v1517 = vpop.f32.mrb[0].mxu0
        %v1518 = vadd.f32 %v1406, %v1517
        %v1519 = vpop.f32.mrb[0].mxu0
        %1520 = vmatprep.mubr.bf16.mxu0 0
        %1521 = vmatmul.mubr.bf16.gmra.mrb[0].mxu0 %v1381
        %v1522 = vpop.f32.mrb[0].mxu0
        %v1523 = vadd.f32 %v1406, %v1522
        %v1524 = vpop.f32.mrb[0].mxu0
        %v1525 = vpop.f32.mrb[0].mxu0
        %v1526 = vadd.f32 %v1406, %v1525
        %v1527 = vpop.f32.mrb[0].mxu0
        %1528 = vmatprep.mubr.bf16.mxu0 0
        %1529 = vmatmul.mubr.bf16.gmra.mrb[0].mxu0 %v1382
        %v1530 = vpop.f32.mrb[0].mxu0
        %v1531 = vadd.f32 %v1406, %v1530
        %v1532 = vpop.f32.mrb[0].mxu0
        %v1533 = vpop.f32.mrb[0].mxu0
        %v1534 = vadd.f32 %v1406, %v1533
        %v1535 = vpop.f32.mrb[0].mxu0
        %1536 = vmatprep.mubr.bf16.mxu0 0
        %1537 = vmatmul.mubr.bf16.gmra.mrb[0].mxu0 %v1383
        %v1538 = vpop.f32.mrb[0].mxu0
        %v1539 = vadd.f32 %v1406, %v1538
        %v1540 = vpop.f32.mrb[0].mxu0
        %v1541 = vpop.f32.mrb[0].mxu0
        %v1542 = vadd.f32 %v1406, %v1541
        %v1543 = vpop.f32.mrb[0].mxu0
        %1544 = vmatprep.mubr.bf16.mxu0 0
        %1545 = vmatmul.mubr.bf16.gmra.mrb[0].mxu0 %v1384
        %v1546 = vpop.f32.mrb[0].mxu0
        %v1547 = vadd.f32 %v1406, %v1546
        %v1548 = vpop.f32.mrb[0].mxu0
        %v1549 = vpop.f32.mrb[0].mxu0
        %v1550 = vadd.f32 %v1406, %v1549
        %v1551 = vpop.f32.mrb[0].mxu0
        %1552 = vdwg.mxu0
        %p1553 = scmp.lt.s32.totalorder %s41, 2
        // Predicated region
        $region125: #{tpu_custom_call.1} parent=87 // pred_check
          %p1554 = pneg %p1553
        $region126: #{tpu_custom_call.1} parent=87 // pred_check_branch
          %1556 = sbr.rel (%p1554) target = $region128
        $region127: #{tpu_custom_call.1} parent=87 // pred_region
          %v1557 = vmax.f32 %v1491, 0.0
          %v1558 = vmax.f32 %v1494, 0.0
          %v1559 = vmax.f32 %v1499, 0.0
          %v1560 = vmax.f32 %v1502, 0.0
          %v1561 = vmax.f32 %v1507, 0.0
          %v1562 = vmax.f32 %v1510, 0.0
          %v1563 = vmax.f32 %v1515, 0.0
          %v1564 = vmax.f32 %v1518, 0.0
          %v1565 = vmax.f32 %v1523, 0.0
          %v1566 = vmax.f32 %v1526, 0.0
          %v1567 = vmax.f32 %v1531, 0.0
          %v1568 = vmax.f32 %v1534, 0.0
          %v1569 = vmax.f32 %v1539, 0.0
          %v1570 = vmax.f32 %v1542, 0.0
          %v1571 = vmax.f32 %v1547, 0.0
          %v1572 = vmax.f32 %v1550, 0.0
          %v1573 = vpack.c.bf16 %v1558, %v1557
          %v1574 = vpack.c.bf16 %v1560, %v1559
          %v1575 = vpack.c.bf16 %v1562, %v1561
          %v1576 = vpack.c.bf16 %v1564, %v1563
          %v1577 = vpack.c.bf16 %v1566, %v1565
          %v1578 = vpack.c.bf16 %v1568, %v1567
          %v1579 = vpack.c.bf16 %v1570, %v1569
          %v1580 = vpack.c.bf16 %v1572, %v1571
          %1581 = vst [vmem:[#allocation2] sm:$0xff] %v1573
          %1582 = vst [vmem:[#allocation2 + $0x8] sm:$0xff] %v1574
          %1583 = vst [vmem:[#allocation2 + $0x10] sm:$0xff] %v1575
          %1584 = vst [vmem:[#allocation2 + $0x18] sm:$0xff] %v1576
          %1585 = vst [vmem:[#allocation2 + $0x20] sm:$0xff] %v1577
          %1586 = vst [vmem:[#allocation2 + $0x28] sm:$0xff] %v1578
          %1587 = vst [vmem:[#allocation2 + $0x30] sm:$0xff] %v1579
          %1588 = vst [vmem:[#allocation2 + $0x38] sm:$0xff] %v1580
        $region128: #{tpu_custom_call.1} parent=87 // pred_fallthru
          _
        %p1589 = scmp.eq.s32.totalorder %s41, 2
        // Predicated region
        $region129: #{tpu_custom_call.1} parent=87 // pred_check
          %p1590 = pneg %p1589
        $region130: #{tpu_custom_call.1} parent=87 // pred_check_branch
          %1592 = sbr.rel (%p1590) target = $region132
        $region131: #{tpu_custom_call.1} parent=87 // pred_region
          %v1593 = vld [vmem:[%s8] sm:$0xff]
          %1594 = vmatprep.subr.mxu0 0.0
          %1595 = vmatpush1.msra.mxu0 %v1491
          %1596 = vmatprep.subr.mxu0 0.0
          %1597 = vmatpush1.msra.mxu0 %v1494
          %1598 = vmatprep.subr.mxu0 0.0
          %1599 = vmatpush1.msra.mxu0 %v1499
          %1600 = vmatprep.subr.mxu0 0.0
          %1601 = vmatpush1.msra.mxu0 %v1502
          %1602 = vmatprep.subr.mxu0 0.0
          %1603 = vmatpush1.msra.mxu0 %v1507
          %1604 = vmatprep.subr.mxu0 0.0
          %1605 = vmatpush1.msra.mxu0 %v1510
          %1606 = vmatprep.subr.mxu0 0.0
          %1607 = vmatpush1.msra.mxu0 %v1515
          %1608 = vmatprep.subr.mxu0 0.0
          %1609 = vmatpush1.msra.mxu0 %v1518
          %1610 = vmatprep.subr.mxu0 0.0
          %1611 = vmatpush1.msra.mxu0 %v1523
          %1612 = vmatprep.subr.mxu0 0.0
          %1613 = vmatpush1.msra.mxu0 %v1526
          %1614 = vmatprep.subr.mxu0 0.0
          %1615 = vmatpush1.msra.mxu0 %v1531
          %1616 = vmatprep.subr.mxu0 0.0
          %1617 = vmatpush1.msra.mxu0 %v1534
          %1618 = vmatprep.subr.mxu0 0.0
          %1619 = vmatpush1.msra.mxu0 %v1539
          %1620 = vmatprep.subr.mxu0 0.0
          %1621 = vmatpush1.msra.mxu0 %v1542
          %1622 = vmatprep.subr.mxu0 0.0
          %1623 = vmatpush1.msra.mxu0 %v1547
          %1624 = vmatprep.subr.mxu0 0.0
          %1625 = vmatpush1.msra.mxu0 %v1550
          %1626 = vmatprep.subr.mxu0 0.0
          %1627 = vmatpush1.msra.mxu0 0.0
          %1628 = vmatprep.subr.mxu0 0.0
          %1629 = vmatpush1.msra.mxu0 0.0
          %1630 = vmatprep.subr.mxu0 0.0
          %1631 = vmatpush1.msra.mxu0 0.0
          %1632 = vmatprep.subr.mxu0 0.0
          %1633 = vmatpush1.msra.mxu0 0.0
          %1634 = vmatprep.subr.mxu0 0.0
          %1635 = vmatpush1.msra.mxu0 0.0
          %1636 = vmatprep.subr.mxu0 0.0
          %1637 = vmatpush1.msra.mxu0 0.0
          %1638 = vmatprep.subr.mxu0 0.0
          %1639 = vmatpush1.msra.mxu0 0.0
          %1640 = vmatprep.subr.mxu0 0.0
          %1641 = vmatpush1.msra.mxu0 0.0
          %1642 = vmatprep.subr.mxu0 0.0
          %1643 = vmatpush1.msra.mxu0 0.0
          %1644 = vmatprep.subr.mxu0 0.0
          %1645 = vmatpush1.msra.mxu0 0.0
          %1646 = vmatprep.subr.mxu0 0.0
          %1647 = vmatpush1.msra.mxu0 0.0
          %1648 = vmatprep.subr.mxu0 0.0
          %1649 = vmatpush1.msra.mxu0 0.0
          %1650 = vmatprep.subr.mxu0 0.0
          %1651 = vmatpush1.msra.mxu0 0.0
          %1652 = vmatprep.subr.mxu0 0.0
          %1653 = vmatpush1.msra.mxu0 0.0
          %1654 = vmatprep.subr.mxu0 0.0
          %1655 = vmatpush1.msra.mxu0 0.0
          %1656 = vmatprep.subr.mxu0 0.0
          %1657 = vmatpush1.msra.mxu0 0.0
          %1658 = vmatprep.mubr.f32.mxu0 0.0
          %1659 = vmatmul.mubr.f32.gmra.mrb[0].mxu0 %v1593
          %v1660 = vpop.f32.mrb[0].mxu0
          %v1661 = vadd.f32 0.0, %v1660
          %v1662 = vpop.f32.mrb[0].mxu0
          %1663 = vdwg.mxu0
          %v1664 = vld [vmem:[#allocation11] sm:$0xff]
          %v1665 = vld [vmem:[#allocation11 + $0x8] sm:$0xff]
          %v1666 = vld [vmem:[#allocation11 + $0x10] sm:$0xff]
          %v1667 = vld [vmem:[#allocation11 + $0x18] sm:$0xff]
          %v1668 = vld [vmem:[#allocation11 + $0x20] sm:$0xff]
          %v1669 = vld [vmem:[#allocation11 + $0x28] sm:$0xff]
          %v1670 = vld [vmem:[#allocation11 + $0x30] sm:$0xff]
          %v1671 = vld [vmem:[#allocation11 + $0x38] sm:$0xff]
          %v1672 = vld [vmem:[#allocation11 + $0x40] sm:$0xff]
          %v1673 = vld [vmem:[#allocation11 + $0x48] sm:$0xff]
          %v1674 = vld [vmem:[#allocation11 + $0x50] sm:$0xff]
          %v1675 = vld [vmem:[#allocation11 + $0x58] sm:$0xff]
          %v1676 = vld [vmem:[#allocation11 + $0x60] sm:$0xff]
          %v1677 = vld [vmem:[#allocation11 + $0x68] sm:$0xff]
          %v1678 = vld [vmem:[#allocation11 + $0x70] sm:$0xff]
          %v1679 = vld [vmem:[#allocation11 + $0x78] sm:$0xff]
          %v1680 = vld [vmem:[%s10] sm:$0x1]
          %v1682 = vlaneseq
          %v1683 = vshrl.u32 %v1682, 7
          %v1684 = vsub.s32 0, %v1683
          %v1685 = vrot.slane %v1680, %v1684
          %1687 = vmatprep.subr.mxu0 0.0
          %1688 = vmatpush1.msra.mxu0 %v1664
          %1689 = vmatprep.subr.mxu0 0.0
          %1690 = vmatpush1.msra.mxu0 %v1665
          %1691 = vmatprep.subr.mxu0 0.0
          %1692 = vmatpush1.msra.mxu0 %v1666
          %1693 = vmatprep.subr.mxu0 0.0
          %1694 = vmatpush1.msra.mxu0 %v1667
          %1695 = vmatprep.subr.mxu0 0.0
          %1696 = vmatpush1.msra.mxu0 %v1668
          %1697 = vmatprep.subr.mxu0 0.0
          %1698 = vmatpush1.msra.mxu0 %v1669
          %1699 = vmatprep.subr.mxu0 0.0
          %1700 = vmatpush1.msra.mxu0 %v1670
          %1701 = vmatprep.subr.mxu0 0.0
          %1702 = vmatpush1.msra.mxu0 %v1671
          %1703 = vmatprep.subr.mxu0 0.0
          %1704 = vmatpush1.msra.mxu0 %v1672
          %1705 = vmatprep.subr.mxu0 0.0
          %1706 = vmatpush1.msra.mxu0 %v1673
          %1707 = vmatprep.subr.mxu0 0.0
          %1708 = vmatpush1.msra.mxu0 %v1674
          %1709 = vmatprep.subr.mxu0 0.0
          %1710 = vmatpush1.msra.mxu0 %v1675
          %1711 = vmatprep.subr.mxu0 0.0
          %1712 = vmatpush1.msra.mxu0 %v1676
          %1713 = vmatprep.subr.mxu0 0.0
          %1714 = vmatpush1.msra.mxu0 %v1677
          %1715 = vmatprep.subr.mxu0 0.0
          %1716 = vmatpush1.msra.mxu0 %v1678
          %1717 = vmatprep.subr.mxu0 0.0
          %1718 = vmatpush1.msra.mxu0 %v1679
          %1719 = vmatprep.subr.mxu0 0.0
          %1720 = vmatpush1.msra.mxu0 0.0
          %1721 = vmatprep.subr.mxu0 0.0
          %1722 = vmatpush1.msra.mxu0 0.0
          %1723 = vmatprep.subr.mxu0 0.0
          %1724 = vmatpush1.msra.mxu0 0.0
          %1725 = vmatprep.subr.mxu0 0.0
          %1726 = vmatpush1.msra.mxu0 0.0
          %1727 = vmatprep.subr.mxu0 0.0
          %1728 = vmatpush1.msra.mxu0 0.0
          %1729 = vmatprep.subr.mxu0 0.0
          %1730 = vmatpush1.msra.mxu0 0.0
          %1731 = vmatprep.subr.mxu0 0.0
          %1732 = vmatpush1.msra.mxu0 0.0
          %1733 = vmatprep.subr.mxu0 0.0
          %1734 = vmatpush1.msra.mxu0 0.0
          %1735 = vmatprep.subr.mxu0 0.0
          %1736 = vmatpush1.msra.mxu0 0.0
          %1737 = vmatprep.subr.mxu0 0.0
          %1738 = vmatpush1.msra.mxu0 0.0
          %1739 = vmatprep.subr.mxu0 0.0
          %1740 = vmatpush1.msra.mxu0 0.0
          %1741 = vmatprep.subr.mxu0 0.0
          %1742 = vmatpush1.msra.mxu0 0.0
          %1743 = vmatprep.subr.mxu0 0.0
          %1744 = vmatpush1.msra.mxu0 0.0
          %1745 = vmatprep.subr.mxu0 0.0
          %1746 = vmatpush1.msra.mxu0 0.0
          %1747 = vmatprep.subr.mxu0 0.0
          %1748 = vmatpush1.msra.mxu0 0.0
          %1749 = vmatprep.subr.mxu0 0.0
          %1750 = vmatpush1.msra.mxu0 0.0
          %1751 = vmatprep.mubr.f32.mxu0 0.0
          %1752 = vmatmul.mubr.f32.gmra.mrb[0].mxu0 %v1661
          %v1753 = vpop.f32.mrb[0].mxu0
          %v1754 = vadd.f32 %v1685, %v1753
          %v1755 = vpop.f32.mrb[0].mxu0
          %1756 = vdwg.mxu0
          %v1757 = vld [vmem:[#allocation12] sm:$0xff]
          %v1758 = vld [vmem:[#allocation12 + $0x8] sm:$0xff]
          %v1759 = vld [vmem:[#allocation12 + $0x10] sm:$0xff]
          %v1760 = vld [vmem:[#allocation12 + $0x18] sm:$0xff]
          %v1761 = vld [vmem:[#allocation12 + $0x20] sm:$0xff]
          %v1762 = vld [vmem:[#allocation12 + $0x28] sm:$0xff]
          %v1763 = vld [vmem:[#allocation12 + $0x30] sm:$0xff]
          %v1764 = vld [vmem:[#allocation12 + $0x38] sm:$0xff]
          %v1765 = vld [vmem:[#allocation12 + $0x40] sm:$0xff]
          %v1766 = vld [vmem:[#allocation12 + $0x48] sm:$0xff]
          %v1767 = vld [vmem:[#allocation12 + $0x50] sm:$0xff]
          %v1768 = vld [vmem:[#allocation12 + $0x58] sm:$0xff]
          %v1769 = vld [vmem:[#allocation12 + $0x60] sm:$0xff]
          %v1770 = vld [vmem:[#allocation12 + $0x68] sm:$0xff]
          %v1771 = vld [vmem:[#allocation12 + $0x70] sm:$0xff]
          %v1772 = vld [vmem:[#allocation12 + $0x78] sm:$0xff]
          %v1773 = vld [vmem:[%s12] sm:$0x1]
          %v1775 = vlaneseq
          %v1776 = vshrl.u32 %v1775, 7
          %v1777 = vsub.s32 0, %v1776
          %v1778 = vrot.slane %v1773, %v1777
          %1780 = vmatprep.subr.mxu0 0.0
          %1781 = vmatpush1.msra.mxu0 %v1757
          %1782 = vmatprep.subr.mxu0 0.0
          %1783 = vmatpush1.msra.mxu0 %v1758
          %1784 = vmatprep.subr.mxu0 0.0
          %1785 = vmatpush1.msra.mxu0 %v1759
          %1786 = vmatprep.subr.mxu0 0.0
          %1787 = vmatpush1.msra.mxu0 %v1760
          %1788 = vmatprep.subr.mxu0 0.0
          %1789 = vmatpush1.msra.mxu0 %v1761
          %1790 = vmatprep.subr.mxu0 0.0
          %1791 = vmatpush1.msra.mxu0 %v1762
          %1792 = vmatprep.subr.mxu0 0.0
          %1793 = vmatpush1.msra.mxu0 %v1763
          %1794 = vmatprep.subr.mxu0 0.0
          %1795 = vmatpush1.msra.mxu0 %v1764
          %1796 = vmatprep.subr.mxu0 0.0
          %1797 = vmatpush1.msra.mxu0 %v1765
          %1798 = vmatprep.subr.mxu0 0.0
          %1799 = vmatpush1.msra.mxu0 %v1766
          %1800 = vmatprep.subr.mxu0 0.0
          %1801 = vmatpush1.msra.mxu0 %v1767
          %1802 = vmatprep.subr.mxu0 0.0
          %1803 = vmatpush1.msra.mxu0 %v1768
          %1804 = vmatprep.subr.mxu0 0.0
          %1805 = vmatpush1.msra.mxu0 %v1769
          %1806 = vmatprep.subr.mxu0 0.0
          %1807 = vmatpush1.msra.mxu0 %v1770
          %1808 = vmatprep.subr.mxu0 0.0
          %1809 = vmatpush1.msra.mxu0 %v1771
          %1810 = vmatprep.subr.mxu0 0.0
          %1811 = vmatpush1.msra.mxu0 %v1772
          %1812 = vmatprep.subr.mxu0 0.0
          %1813 = vmatpush1.msra.mxu0 0.0
          %1814 = vmatprep.subr.mxu0 0.0
          %1815 = vmatpush1.msra.mxu0 0.0
          %1816 = vmatprep.subr.mxu0 0.0
          %1817 = vmatpush1.msra.mxu0 0.0
          %1818 = vmatprep.subr.mxu0 0.0
          %1819 = vmatpush1.msra.mxu0 0.0
          %1820 = vmatprep.subr.mxu0 0.0
          %1821 = vmatpush1.msra.mxu0 0.0
          %1822 = vmatprep.subr.mxu0 0.0
          %1823 = vmatpush1.msra.mxu0 0.0
          %1824 = vmatprep.subr.mxu0 0.0
          %1825 = vmatpush1.msra.mxu0 0.0
          %1826 = vmatprep.subr.mxu0 0.0
          %1827 = vmatpush1.msra.mxu0 0.0
          %1828 = vmatprep.subr.mxu0 0.0
          %1829 = vmatpush1.msra.mxu0 0.0
          %1830 = vmatprep.subr.mxu0 0.0
          %1831 = vmatpush1.msra.mxu0 0.0
          %1832 = vmatprep.subr.mxu0 0.0
          %1833 = vmatpush1.msra.mxu0 0.0
          %1834 = vmatprep.subr.mxu0 0.0
          %1835 = vmatpush1.msra.mxu0 0.0
          %1836 = vmatprep.subr.mxu0 0.0
          %1837 = vmatpush1.msra.mxu0 0.0
          %1838 = vmatprep.subr.mxu0 0.0
          %1839 = vmatpush1.msra.mxu0 0.0
          %1840 = vmatprep.subr.mxu0 0.0
          %1841 = vmatpush1.msra.mxu0 0.0
          %1842 = vmatprep.subr.mxu0 0.0
          %1843 = vmatpush1.msra.mxu0 0.0
          %1844 = vmatprep.mubr.f32.mxu0 0.0
          %1845 = vmatmul.mubr.f32.gmra.mrb[0].mxu0 %v1754
          %v1846 = vpop.f32.mrb[0].mxu0
          %v1847 = vadd.f32 %v1778, %v1846
          %v1848 = vpop.f32.mrb[0].mxu0
          %1849 = vdwg.mxu0
          %v1850 = vmax.f32 %v1847, 0.0
          %v1851 = vld [vmem:[#allocation14] sm:$0xff]
          %v1852 = vld [vmem:[#allocation14 + $0x8] sm:$0xff]
          %v1853 = vld [vmem:[#allocation14 + $0x10] sm:$0xff]
          %v1854 = vld [vmem:[#allocation14 + $0x18] sm:$0xff]
          %v1855 = vld [vmem:[#allocation14 + $0x20] sm:$0xff]
          %v1856 = vld [vmem:[#allocation14 + $0x28] sm:$0xff]
          %v1857 = vld [vmem:[#allocation14 + $0x30] sm:$0xff]
          %v1858 = vld [vmem:[#allocation14 + $0x38] sm:$0xff]
          %v1859 = vld [vmem:[#allocation14 + $0x40] sm:$0xff]
          %v1860 = vld [vmem:[#allocation14 + $0x48] sm:$0xff]
          %v1861 = vld [vmem:[#allocation14 + $0x50] sm:$0xff]
          %v1862 = vld [vmem:[#allocation14 + $0x58] sm:$0xff]
          %v1863 = vld [vmem:[#allocation14 + $0x60] sm:$0xff]
          %v1864 = vld [vmem:[#allocation14 + $0x68] sm:$0xff]
          %v1865 = vld [vmem:[#allocation14 + $0x70] sm:$0xff]
          %v1866 = vld [vmem:[#allocation14 + $0x78] sm:$0xff]
          %v1867 = vld [vmem:[%s14] sm:$0x1]
          %v1869 = vlaneseq
          %v1870 = vshrl.u32 %v1869, 7
          %v1871 = vsub.s32 0, %v1870
          %v1872 = vrot.slane %v1867, %v1871
          %1874 = vmatprep.subr.mxu0 0.0
          %1875 = vmatpush1.msra.mxu0 %v1851
          %1876 = vmatprep.subr.mxu0 0.0
          %1877 = vmatpush1.msra.mxu0 %v1852
          %1878 = vmatprep.subr.mxu0 0.0
          %1879 = vmatpush1.msra.mxu0 %v1853
          %1880 = vmatprep.subr.mxu0 0.0
          %1881 = vmatpush1.msra.mxu0 %v1854
          %1882 = vmatprep.subr.mxu0 0.0
          %1883 = vmatpush1.msra.mxu0 %v1855
          %1884 = vmatprep.subr.mxu0 0.0
          %1885 = vmatpush1.msra.mxu0 %v1856
          %1886 = vmatprep.subr.mxu0 0.0
          %1887 = vmatpush1.msra.mxu0 %v1857
          %1888 = vmatprep.subr.mxu0 0.0
          %1889 = vmatpush1.msra.mxu0 %v1858
          %1890 = vmatprep.subr.mxu0 0.0
          %1891 = vmatpush1.msra.mxu0 %v1859
          %1892 = vmatprep.subr.mxu0 0.0
          %1893 = vmatpush1.msra.mxu0 %v1860
          %1894 = vmatprep.subr.mxu0 0.0
          %1895 = vmatpush1.msra.mxu0 %v1861
          %1896 = vmatprep.subr.mxu0 0.0
          %1897 = vmatpush1.msra.mxu0 %v1862
          %1898 = vmatprep.subr.mxu0 0.0
          %1899 = vmatpush1.msra.mxu0 %v1863
          %1900 = vmatprep.subr.mxu0 0.0
          %1901 = vmatpush1.msra.mxu0 %v1864
          %1902 = vmatprep.subr.mxu0 0.0
          %1903 = vmatpush1.msra.mxu0 %v1865
          %1904 = vmatprep.subr.mxu0 0.0
          %1905 = vmatpush1.msra.mxu0 %v1866
          %1906 = vmatprep.subr.mxu0 0.0
          %1907 = vmatpush1.msra.mxu0 0.0
          %1908 = vmatprep.subr.mxu0 0.0
          %1909 = vmatpush1.msra.mxu0 0.0
          %1910 = vmatprep.subr.mxu0 0.0
          %1911 = vmatpush1.msra.mxu0 0.0
          %1912 = vmatprep.subr.mxu0 0.0
          %1913 = vmatpush1.msra.mxu0 0.0
          %1914 = vmatprep.subr.mxu0 0.0
          %1915 = vmatpush1.msra.mxu0 0.0
          %1916 = vmatprep.subr.mxu0 0.0
          %1917 = vmatpush1.msra.mxu0 0.0
          %1918 = vmatprep.subr.mxu0 0.0
          %1919 = vmatpush1.msra.mxu0 0.0
          %1920 = vmatprep.subr.mxu0 0.0
          %1921 = vmatpush1.msra.mxu0 0.0
          %1922 = vmatprep.subr.mxu0 0.0
          %1923 = vmatpush1.msra.mxu0 0.0
          %1924 = vmatprep.subr.mxu0 0.0
          %1925 = vmatpush1.msra.mxu0 0.0
          %1926 = vmatprep.subr.mxu0 0.0
          %1927 = vmatpush1.msra.mxu0 0.0
          %1928 = vmatprep.subr.mxu0 0.0
          %1929 = vmatpush1.msra.mxu0 0.0
          %1930 = vmatprep.subr.mxu0 0.0
          %1931 = vmatpush1.msra.mxu0 0.0
          %1932 = vmatprep.subr.mxu0 0.0
          %1933 = vmatpush1.msra.mxu0 0.0
          %1934 = vmatprep.subr.mxu0 0.0
          %1935 = vmatpush1.msra.mxu0 0.0
          %1936 = vmatprep.subr.mxu0 0.0
          %1937 = vmatpush1.msra.mxu0 0.0
          %1938 = vmatprep.mubr.f32.mxu0 0.0
          %1939 = vmatmul.mubr.f32.gmra.mrb[0].mxu0 %v1850
          %v1940 = vpop.f32.mrb[0].mxu0
          %v1941 = vadd.f32 %v1872, %v1940
          %v1942 = vpop.f32.mrb[0].mxu0
          %1943 = vdwg.mxu0
          %v1944 = vmax.f32 %v1941, 0.0
          %v1945 = vld [vmem:[#allocation15] sm:$0xff]
          %v1946 = vld [vmem:[#allocation15 + $0x8] sm:$0xff]
          %v1947 = vld [vmem:[#allocation15 + $0x10] sm:$0xff]
          %v1948 = vld [vmem:[#allocation15 + $0x18] sm:$0xff]
          %v1949 = vld [vmem:[#allocation15 + $0x20] sm:$0xff]
          %v1950 = vld [vmem:[#allocation15 + $0x28] sm:$0xff]
          %v1951 = vld [vmem:[#allocation15 + $0x30] sm:$0xff]
          %v1952 = vld [vmem:[#allocation15 + $0x38] sm:$0xff]
          %v1953 = vld [vmem:[#allocation15 + $0x40] sm:$0xff]
          %v1954 = vld [vmem:[#allocation15 + $0x48] sm:$0xff]
          %v1955 = vld [vmem:[#allocation15 + $0x50] sm:$0xff]
          %v1956 = vld [vmem:[#allocation15 + $0x58] sm:$0xff]
          %v1957 = vld [vmem:[#allocation15 + $0x60] sm:$0xff]
          %v1958 = vld [vmem:[#allocation15 + $0x68] sm:$0xff]
          %v1959 = vld [vmem:[#allocation15 + $0x70] sm:$0xff]
          %v1960 = vld [vmem:[#allocation15 + $0x78] sm:$0xff]
          %v1961 = vld [vmem:[%s16] sm:$0x1]
          %v1963 = vlaneseq
          %v1964 = vshrl.u32 %v1963, 7
          %v1965 = vsub.s32 0, %v1964
          %v1966 = vrot.slane %v1961, %v1965
          %1968 = vmatprep.subr.mxu0 0.0
          %1969 = vmatpush1.msra.mxu0 %v1945
          %1970 = vmatprep.subr.mxu0 0.0
          %1971 = vmatpush1.msra.mxu0 %v1946
          %1972 = vmatprep.subr.mxu0 0.0
          %1973 = vmatpush1.msra.mxu0 %v1947
          %1974 = vmatprep.subr.mxu0 0.0
          %1975 = vmatpush1.msra.mxu0 %v1948
          %1976 = vmatprep.subr.mxu0 0.0
          %1977 = vmatpush1.msra.mxu0 %v1949
          %1978 = vmatprep.subr.mxu0 0.0
          %1979 = vmatpush1.msra.mxu0 %v1950
          %1980 = vmatprep.subr.mxu0 0.0
          %1981 = vmatpush1.msra.mxu0 %v1951
          %1982 = vmatprep.subr.mxu0 0.0
          %1983 = vmatpush1.msra.mxu0 %v1952
          %1984 = vmatprep.subr.mxu0 0.0
          %1985 = vmatpush1.msra.mxu0 %v1953
          %1986 = vmatprep.subr.mxu0 0.0
          %1987 = vmatpush1.msra.mxu0 %v1954
          %1988 = vmatprep.subr.mxu0 0.0
          %1989 = vmatpush1.msra.mxu0 %v1955
          %1990 = vmatprep.subr.mxu0 0.0
          %1991 = vmatpush1.msra.mxu0 %v1956
          %1992 = vmatprep.subr.mxu0 0.0
          %1993 = vmatpush1.msra.mxu0 %v1957
          %1994 = vmatprep.subr.mxu0 0.0
          %1995 = vmatpush1.msra.mxu0 %v1958
          %1996 = vmatprep.subr.mxu0 0.0
          %1997 = vmatpush1.msra.mxu0 %v1959
          %1998 = vmatprep.subr.mxu0 0.0
          %1999 = vmatpush1.msra.mxu0 %v1960
          %2000 = vmatprep.subr.mxu0 0.0
          %2001 = vmatpush1.msra.mxu0 0.0
          %2002 = vmatprep.subr.mxu0 0.0
          %2003 = vmatpush1.msra.mxu0 0.0
          %2004 = vmatprep.subr.mxu0 0.0
          %2005 = vmatpush1.msra.mxu0 0.0
          %2006 = vmatprep.subr.mxu0 0.0
          %2007 = vmatpush1.msra.mxu0 0.0
          %2008 = vmatprep.subr.mxu0 0.0
          %2009 = vmatpush1.msra.mxu0 0.0
          %2010 = vmatprep.subr.mxu0 0.0
          %2011 = vmatpush1.msra.mxu0 0.0
          %2012 = vmatprep.subr.mxu0 0.0
          %2013 = vmatpush1.msra.mxu0 0.0
          %2014 = vmatprep.subr.mxu0 0.0
          %2015 = vmatpush1.msra.mxu0 0.0
          %2016 = vmatprep.subr.mxu0 0.0
          %2017 = vmatpush1.msra.mxu0 0.0
          %2018 = vmatprep.subr.mxu0 0.0
          %2019 = vmatpush1.msra.mxu0 0.0
          %2020 = vmatprep.subr.mxu0 0.0
          %2021 = vmatpush1.msra.mxu0 0.0
          %2022 = vmatprep.subr.mxu0 0.0
          %2023 = vmatpush1.msra.mxu0 0.0
          %2024 = vmatprep.subr.mxu0 0.0
          %2025 = vmatpush1.msra.mxu0 0.0
          %2026 = vmatprep.subr.mxu0 0.0
          %2027 = vmatpush1.msra.mxu0 0.0
          %2028 = vmatprep.subr.mxu0 0.0
          %2029 = vmatpush1.msra.mxu0 0.0
          %2030 = vmatprep.subr.mxu0 0.0
          %2031 = vmatpush1.msra.mxu0 0.0
          %2032 = vmatprep.mubr.f32.mxu0 0.0
          %2033 = vmatmul.mubr.f32.gmra.mrb[0].mxu0 %v1944
          %v2034 = vpop.f32.mrb[0].mxu0
          %v2035 = vadd.f32 %v1966, %v2034
          %v2036 = vpop.f32.mrb[0].mxu0
          %2037 = vdwg.mxu0
          %2038 = vst [vmem:[#allocation17] sm:$0xff] %v1754
          %2039 = vst [vmem:[#allocation18] sm:$0xff] %v2035
        $region132: #{tpu_custom_call.1} parent=87 // pred_fallthru
          _
        // Predicated region
        $region133: #{tpu_custom_call.1} parent=87 // pred_check
          %p2040 = pneg %p436
        $region134: #{tpu_custom_call.1} parent=87 // pred_check_branch
          %2042 = sbr.rel (%p2040) target = $region136
        $region135: #{tpu_custom_call.1} parent=87 // pred_region
          %s2044 = ssub.s32 128, 128
          %2045 = vsyncadd [#allocation5], %s2044
          %s2047 = sshll.u32 [#allocation17], 4
          %s2048 = int_to_ptr.vmem [resolvable:$true] %s2047
          %2050 = dma.vmem_to_hbm [thread:$0]  %s2048, 128, %s17, [#allocation5]
        $region136: #{tpu_custom_call.1} parent=87 // pred_fallthru
          _
        // Predicated region
        $region137: #{tpu_custom_call.1} parent=87 // pred_check
          %p2051 = pneg %p457
        $region138: #{tpu_custom_call.1} parent=87 // pred_check_branch
          %2053 = sbr.rel (%p2051) target = $region140
        $region139: #{tpu_custom_call.1} parent=87 // pred_region
          %s2055 = ssub.s32 128, 128
          %2056 = vsyncadd [#allocation19], %s2055
          %s2058 = sshll.u32 [#allocation18], 4
          %s2059 = int_to_ptr.vmem [resolvable:$true] %s2058
          %2061 = dma.vmem_to_hbm [thread:$0]  %s2059, 128, %s18, [#allocation19]
        $region140: #{tpu_custom_call.1} parent=87 // pred_fallthru
          _
        // Predicated region
        $region141: #{tpu_custom_call.1} parent=87 // pred_check
          %p2062 = pneg %p436
        $region142: #{tpu_custom_call.1} parent=87 // pred_check_branch
          %2064 = sbr.rel (%p2062) target = $region144
        $region143: #{tpu_custom_call.1} parent=87 // pred_region
          %2065 = dma.done [#allocation5], 128
        $region144: #{tpu_custom_call.1} parent=87 // pred_fallthru
          _
        // Predicated region
        $region145: #{tpu_custom_call.1} parent=87 // pred_check
          %p2066 = pneg %p457
        $region146: #{tpu_custom_call.1} parent=87 // pred_check_branch
          %2068 = sbr.rel (%p2066) target = $region148
        $region147: #{tpu_custom_call.1} parent=87 // pred_region
          %2069 = dma.done [#allocation19], 128
        $region148: #{tpu_custom_call.1} parent=87 // pred_fallthru
          _
      $region88: #{tpu_custom_call.1} parent=5 // pred_fallthru
        _
      %p2070 = scmp.le.s32.totalorder 2, %s36
      // Predicated region
      $region149: #{tpu_custom_call.1} parent=5 // pred_check
        %p2071 = pneg %p2070
      $region150: #{tpu_custom_call.1} parent=5 // pred_check_branch
        %2073 = sbr.rel (%p2071) target = $region152
      $region151: #{tpu_custom_call.1} parent=5 // pred_region
        %s2074 = ssub.s32 %s36, 2
      $region152: #{tpu_custom_call.1} parent=5 // pred_fallthru
        _
    $region6: #{tpu_custom_call.1} parent=1 // loop_footer
      %s40 = sadd.s32 1, %s36
    $region7: #{tpu_custom_call.1} parent=1 // loop_footer_branch
      %35 = sbr.rel target = $region3
    $region8: #{tpu_custom_call.1} parent=1 // loop_exit
      _
    %2075 = vsyncpa [#allocation4], 1
    %s2076 = scalar_lea.sflag [#allocation4], 1
    %2077 = vsyncpa %s2076, 1
    %2078 = vsyncpa [#allocation7], 1
    %s2079 = scalar_lea.sflag [#allocation7], 1
    %2080 = vsyncpa %s2079, 1
    %2081 = vsyncpa [#allocation10], 1
    %s2082 = scalar_lea.sflag [#allocation10], 1
    %2083 = vsyncpa %s2082, 1
    %2084 = vsyncpa [#allocation13], 1
    %2085 = vsyncpa [#allocation16], 1
    %2086 = vsyncpa [#allocation5], 1
    %s2087 = scalar_lea.sflag [#allocation5], 1
    %2088 = vsyncpa %s2087, 1
    %2089 = vsyncpa [#allocation19], 1

</llo_original>
